<compile_context>
chip_gen: v7x
topology: tpu7x:2x2x1
jax: 0.10.0
libtpu: 0.0.40
codegen_flags: <defaults>
</compile_context>

<pallas_src>
import jax
import jax.numpy as jnp
from jax import lax
from jax.experimental import pallas as pl
from jax.experimental.pallas import tpu as pltpu


def _round_up(x: int, m: int) -> int:
    return ((x + m - 1) // m) * m


def _make_supcon_kernel(*, tm, tn, n_valid, inv_temp, loss_scale):
    """Kernel body with static hyper-params closed over (Python scalars only)."""
    neg_big = -1e30  # Python float -> inlined literal (no captured array constant)

    def kernel(feat_r_ref, feat_ct_ref, gid_r_ref, gid_c_ref, out_ref,
               m_sc, l_sc, s_sc, c_sc):
        # feat_r_ref : [TM, Dp] bf16 anchor rows              (row tile i)
        # feat_ct_ref: [Dp, TN] bf16 contrast cols, pre-transposed (col tile j)
        # gid_r_ref  : [TM, 1]  int32 group id per anchor row (-1 => padding)
        # gid_c_ref  : [1, TN]  int32 group id per contrast column
        # out_ref    : [1, 8, 128] per-row-tile partial loss sum (lane-dense)
        i = pl.program_id(0)
        j = pl.program_id(1)

        @pl.when(j == 0)
        def _init():
            m_sc[...] = jnp.full_like(m_sc, neg_big)
            l_sc[...] = jnp.zeros_like(l_sc)
            s_sc[...] = jnp.zeros_like(s_sc)
            c_sc[...] = jnp.zeros_like(c_sc)

        # 1/temperature folded into the small bf16 anchor tile (tm x Dp), not the
        # tm x tn f32 sim.  Exact for power-of-two temperatures.
        a = feat_r_ref[...] * inv_temp                      # bf16 [TM, Dp]
        bt = feat_ct_ref[...]                               # bf16 [Dp, TN]
        sim = jnp.dot(a, bt, preferred_element_type=jnp.float32)   # f32 [TM, TN]

        # Thin per-column validity vector (padded columns beyond n_valid).
        col_ids = j * tn + lax.broadcasted_iota(jnp.int32, (1, tn), 1)   # [1, TN]
        col_valid = col_ids < n_valid                                    # [1, TN]

        gid_eq = gid_r_ref[...] == gid_c_ref[...]            # bool [TM, TN]

        # Self-exclusion (diagonal) only matters on tiles intersecting the diagonal.
        def _with_diag():
            row_ids = i * tm + lax.broadcasted_iota(jnp.int32, (tm, tn), 0)
            lmask = jnp.logical_and(row_ids != col_ids, col_valid)       # [TM, TN]
            sim_m = jnp.where(lmask, sim, neg_big)
            pmask = jnp.where(jnp.logical_and(gid_eq, lmask), 1.0, 0.0)
            return sim_m, pmask.astype(jnp.float32)

        def _no_diag():
            sim_m = jnp.where(col_valid, sim, neg_big)                   # bcast (1,TN)
            pmask = jnp.where(jnp.logical_and(gid_eq, col_valid), 1.0, 0.0)
            return sim_m, pmask.astype(jnp.float32)

        diag_hit = jnp.logical_and(i * tm < (j + 1) * tn, j * tn < (i + 1) * tm)
        sim_m, pmask_f = lax.cond(diag_hit, _with_diag, _no_diag)

        # Online softmax over valid non-self columns: sim_m drives BOTH the running
        # max and the exp; masked entries (= -1e30) underflow to exactly 0 in exp.
        m_prev = m_sc[...]
        m_new = jnp.maximum(m_prev, jnp.max(sim_m, axis=1, keepdims=True))
        alpha = jnp.exp(m_prev - m_new)
        p = jnp.exp(sim_m - m_new)                                       # [TM, TN]

        l_sc[...] = alpha * l_sc[...] + jnp.sum(p, axis=1, keepdims=True)
        s_sc[...] = s_sc[...] + jnp.sum(pmask_f * sim, axis=1, keepdims=True)
        c_sc[...] = c_sc[...] + jnp.sum(pmask_f, axis=1, keepdims=True)
        m_sc[...] = m_new

        @pl.when(j == pl.num_programs(1) - 1)
        def _finalize():
            # sum(mask*log_prob) = sum(mask*sim) - cnt*(logsumexp over non-self cols)
            lse = m_sc[...] + jnp.log(l_sc[...])             # [TM, 1]
            cnt = c_sc[...]
            mean_log_prob_pos = (s_sc[...] - cnt * lse) / (cnt + 1e-6)
            per_row_loss = loss_scale * mean_log_prob_pos    # [TM, 1]
            row_g = i * tm + lax.broadcasted_iota(jnp.int32, (tm, 1), 0)
            valid_row = row_g < n_valid
            tile_sum = jnp.sum(jnp.where(valid_row, per_row_loss, 0.0))
            out_ref[...] = jnp.broadcast_to(tile_sum, out_ref.shape)

    return kernel


def supcon_loss(features, labels=None, mask=None, *,
                temperature=1.0, contrast_mode='all', base_temperature=1.0):
    """JAX/Pallas equivalent of SupConLoss.forward (contrast_mode='all')."""
    features = jnp.asarray(features)
    if features.ndim < 3:
        raise ValueError('`features` needs to be [bsz, n_views, ...]')
    if features.ndim > 3:
        features = features.reshape(features.shape[0], features.shape[1], -1)
    if contrast_mode != 'all':
        # TODO(synk): contrast_mode='one' (anchor = view 0 only) not implemented.
        raise NotImplementedError('only contrast_mode="all" is implemented')

    bsz, n_views, dim = features.shape
    n_total = bsz * n_views

    if labels is not None and mask is not None:
        raise ValueError('Cannot define both `labels` and `mask`')
    if mask is not None:
        # TODO(synk): arbitrary (possibly asymmetric) user masks are not expressible
        # as per-sample group ids; not wired into the tiled kernel.
        raise NotImplementedError('explicit `mask` not supported by the Pallas kernel')
    if labels is None:
        base_gid = jnp.arange(bsz, dtype=jnp.int32)          # SimCLR: eye(bsz)
    else:
        labels = jnp.asarray(labels).reshape(bsz, -1)
        if labels.shape[1] != 1:
            # TODO(synk): multi-column labels with any-equality not supported.
            raise NotImplementedError('only scalar per-sample labels supported')
        base_gid = labels[:, 0].astype(jnp.int32)

    # contrast_feature = cat(unbind(features, dim=1), dim=0) -> view-major [N, D]
    contrast_feature = jnp.swapaxes(features, 0, 1).reshape(n_total, dim)
    gid = jnp.tile(base_gid, (n_views,))                      # [N] group id per row

    # ---- tile selection -------------------------------------------------------
    d_pad = _round_up(dim, 128)
    # adaptive tn from {512,256,128} minimizing padded size (ties -> larger tn)
    tn, n_pad = min(((t, _round_up(n_total, t)) for t in (512, 256, 128)),
                    key=lambda p: (p[1], -p[0]))
    # larger anchor tile when D is large (raises HBM-bound arithmetic intensity)
    tm = 512 if d_pad >= 512 else 256
    while tm > 128 and n_pad % tm != 0:
        tm //= 2
    tm = min(tm, n_pad)
    # prefer >=2 row tiles so the "parallel" axis can shard across v7x's two TCs
    if n_pad // tm < 2 and n_pad >= 256:
        tm = n_pad // 2
    n_row_tiles = n_pad // tm
    n_col_tiles = n_pad // tn

    # bf16 features for the MXU (f32 accumulate in-kernel); zero padding is inert.
    feat = jnp.zeros((n_pad, d_pad), jnp.bfloat16)
    feat = feat.at[:n_total, :dim].set(contrast_feature.astype(jnp.bfloat16))
    feat_t = feat.T                                           # [Dp, Np] contrast stream
    gid_pad = jnp.full((n_pad,), -1, jnp.int32).at[:n_total].set(gid)
    gid_row = gid_pad.reshape(n_pad, 1)
    gid_col = gid_pad.reshape(1, n_pad)

    kernel = _make_supcon_kernel(
        tm=tm, tn=tn, n_valid=n_total,
        inv_temp=float(1.0 / temperature),
        loss_scale=float(-(temperature / base_temperature)))

    cost = pl.CostEstimate(
        flops=2 * n_pad * n_pad * d_pad,
        transcendentals=n_pad * n_pad,
        bytes_accessed=(2 * n_pad * d_pad * (1 + n_row_tiles)      # bf16 feature streams
                        + 8 * n_pad                                 # group ids
                        + 4 * n_row_tiles * 8 * 128))               # partials out

    out = pl.pallas_call(
        kernel,
        out_shape=jax.ShapeDtypeStruct((n_row_tiles, 8, 128), jnp.float32),
        grid_spec=pltpu.PrefetchScalarGridSpec(
            num_scalar_prefetch=0,
            grid=(n_row_tiles, n_col_tiles),
            in_specs=[
                pl.BlockSpec((tm, d_pad), lambda i, j: (i, 0)),   # anchor rows
                pl.BlockSpec((d_pad, tn), lambda i, j: (0, j)),   # contrast cols (pre-T)
                pl.BlockSpec((tm, 1), lambda i, j: (i, 0)),       # row group ids
                pl.BlockSpec((1, tn), lambda i, j: (0, j)),       # col group ids
            ],
            out_specs=pl.BlockSpec((1, 8, 128), lambda i, j: (i, 0, 0)),
            scratch_shapes=[pltpu.VMEM((tm, 1), jnp.float32)] * 4,  # m, l, s, cnt
        ),
        compiler_params=pltpu.CompilerParams(
            dimension_semantics=("parallel", "arbitrary"),
            # TODO(synk): 32 MiB keeps v7x (64 MiB VMEM) safe; could be chip-gated
            # to 64+ MiB on v5e/v6e for larger tiles / deeper buffering.
            vmem_limit_bytes=32 * 1024 * 1024),
        cost_estimate=cost,
    )(feat, feat_t, gid_row, gid_col)

    # loss.view(anchor_count, batch_size).mean() == mean over all N anchors
    return jnp.sum(out[:, 0, 0]) / n_total


def supcon_loss_ref(features, labels=None, temperature=1.0, base_temperature=1.0):
    """Pure-JAX reference matching the PyTorch module (contrast_mode='all')."""
    bsz, n_views, dim = features.shape
    cf = jnp.swapaxes(features, 0, 1).reshape(bsz * n_views, dim).astype(jnp.float32)
    n = bsz * n_views
    if labels is None:
        base_mask = jnp.eye(bsz, dtype=jnp.float32)
    else:
        labels = jnp.asarray(labels).reshape(bsz)
        base_mask = (labels[:, None] == labels[None, :]).astype(jnp.float32)
    sim = (cf @ cf.T) / temperature
    logits = sim - jnp.max(sim, axis=1, keepdims=True)
    lmask = 1.0 - jnp.eye(n)
    mask = jnp.tile(base_mask, (n_views, n_views)) * lmask
    exp_logits = jnp.exp(logits) * lmask
    log_prob = logits - jnp.log(jnp.sum(exp_logits, axis=1, keepdims=True))
    mlpp = jnp.sum(mask * log_prob, axis=1) / (jnp.sum(mask, axis=1) + 1e-6)
    return jnp.mean(-(temperature / base_temperature) * mlpp)


if __name__ == "__main__":
    key = jax.random.PRNGKey(0)
    k1, k2 = jax.random.split(key)

    # --- SimCLR case (labels=None), single-tile path -------------------------
    bsz, n_views, dim = 8, 2, 32
    feats = jax.random.normal(k1, (bsz, n_views, dim), dtype=jnp.float32)
    feats = feats / jnp.linalg.norm(feats, axis=-1, keepdims=True)

    loss = jax.block_until_ready(
        supcon_loss(feats, temperature=1.0, base_temperature=1.0))
    # Reference on the same bf16-quantized inputs (kernel feeds the MXU bf16).
    feats_q = feats.astype(jnp.bfloat16).astype(jnp.float32)
    ref = jax.block_until_ready(
        supcon_loss_ref(feats_q, temperature=1.0, base_temperature=1.0))
    assert jnp.allclose(loss, ref, rtol=2e-3, atol=2e-3), (loss, ref)

    # --- Supervised case with labels, multi-tile (multi row & col tiles) -----
    bsz2, n_views2, dim2 = 144, 2, 40
    f2 = jax.random.normal(k2, (bsz2, n_views2, dim2), dtype=jnp.float32)
    f2 = f2 / jnp.linalg.norm(f2, axis=-1, keepdims=True)
    labels2 = jnp.arange(bsz2, dtype=jnp.int32) % 7
    loss2 = jax.block_until_ready(
        supcon_loss(f2, labels=labels2, temperature=0.5, base_temperature=0.5))
    f2_q = f2.astype(jnp.bfloat16).astype(jnp.float32)
    ref2 = jax.block_until_ready(
        supcon_loss_ref(f2_q, labels=labels2, temperature=0.5, base_temperature=0.5))
    assert jnp.allclose(loss2, ref2, rtol=2e-3, atol=2e-3), (loss2, ref2)

    print("KERNEL_OK")
</pallas_src>

<mosaic_0001>
module attributes {stable_mosaic.version = 11 : i64} {
  func.func @kernel(%arg0: i32, %arg1: i32, %arg2: memref<128x128xbf16, #tpu.memory_space<vmem>>, %arg3: memref<128x128xbf16, #tpu.memory_space<vmem>>, %arg4: memref<128x1xi32, #tpu.memory_space<vmem>>, %arg5: memref<1x128xi32, #tpu.memory_space<vmem>>, %arg6: memref<1x8x128xf32, #tpu.memory_space<vmem>>, %arg7: memref<128x1xf32, #tpu.memory_space<vmem>>, %arg8: memref<128x1xf32, #tpu.memory_space<vmem>>, %arg9: memref<128x1xf32, #tpu.memory_space<vmem>>, %arg10: memref<128x1xf32, #tpu.memory_space<vmem>>) attributes {dimension_semantics = [#tpu.dimension_semantics<parallel>, #tpu.dimension_semantics<arbitrary>], iteration_bounds = array<i64: 1, 1>, scalar_prefetch = 0 : i64, scratch_operands = 4 : i64, tpu.core_type = #tpu.core_type<tc>, window_params = [{transform_indices = @transform_0, window_bounds = array<i64: 128, 128>}, {transform_indices = @transform_1, window_bounds = array<i64: 128, 128>}, {transform_indices = @transform_2, window_bounds = array<i64: 128, 1>}, {transform_indices = @transform_3, window_bounds = array<i64: 1, 128>}, {transform_indices = @transform_4, window_bounds = array<i64: 1, 8, 128>}]} {
    %c0_i32 = arith.constant 0 : i32
    %0 = arith.cmpi eq, %arg1, %c0_i32 : i32
    %1 = arith.extui %0 : i1 to i32
    %c0_i32_0 = arith.constant 0 : i32
    %2 = arith.cmpi ne, %1, %c0_i32_0 : i32
    scf.if %2 {
      %cst_37 = arith.constant -1.000000e+30 : f32
      %61 = vector.broadcast %cst_37 : f32 to vector<128x1xf32>
      %c0_38 = arith.constant 0 : index
      %c0_39 = arith.constant 0 : index
      %62 = vector.load %arg7[%c0_38, %c0_39] : memref<128x1xf32, #tpu.memory_space<vmem>>, vector<128x1xf32>
      tpu.vector_store %arg7[%c0_38, %c0_39], %61 {strides = array<i32>} : memref<128x1xf32, #tpu.memory_space<vmem>>, vector<128x1xf32>,
      %cst_40 = arith.constant 0.000000e+00 : f32
      %63 = vector.broadcast %cst_40 : f32 to vector<128x1xf32>
      %c0_41 = arith.constant 0 : index
      %c0_42 = arith.constant 0 : index
      %64 = vector.load %arg8[%c0_41, %c0_42] : memref<128x1xf32, #tpu.memory_space<vmem>>, vector<128x1xf32>
      tpu.vector_store %arg8[%c0_41, %c0_42], %63 {strides = array<i32>} : memref<128x1xf32, #tpu.memory_space<vmem>>, vector<128x1xf32>,
      %cst_43 = arith.constant 0.000000e+00 : f32
      %65 = vector.broadcast %cst_43 : f32 to vector<128x1xf32>
      %c0_44 = arith.constant 0 : index
      %c0_45 = arith.constant 0 : index
      %66 = vector.load %arg9[%c0_44, %c0_45] : memref<128x1xf32, #tpu.memory_space<vmem>>, vector<128x1xf32>
      tpu.vector_store %arg9[%c0_44, %c0_45], %65 {strides = array<i32>} : memref<128x1xf32, #tpu.memory_space<vmem>>, vector<128x1xf32>,
      %cst_46 = arith.constant 0.000000e+00 : f32
      %67 = vector.broadcast %cst_46 : f32 to vector<128x1xf32>
      %c0_47 = arith.constant 0 : index
      %c0_48 = arith.constant 0 : index
      %68 = vector.load %arg10[%c0_47, %c0_48] : memref<128x1xf32, #tpu.memory_space<vmem>>, vector<128x1xf32>
      tpu.vector_store %arg10[%c0_47, %c0_48], %67 {strides = array<i32>} : memref<128x1xf32, #tpu.memory_space<vmem>>, vector<128x1xf32>,
    } else {
    }
    %c0 = arith.constant 0 : index
    %c0_1 = arith.constant 0 : index
    %3 = vector.load %arg2[%c0, %c0_1] : memref<128x128xbf16, #tpu.memory_space<vmem>>, vector<128x128xbf16>
    %cst = arith.constant 1.000000e+00 : bf16
    %4 = vector.broadcast %cst : bf16 to vector<128x128xbf16>
    %5 = arith.mulf %3, %4 : vector<128x128xbf16>
    %c0_2 = arith.constant 0 : index
    %c0_3 = arith.constant 0 : index
    %6 = vector.load %arg3[%c0_2, %c0_3] : memref<128x128xbf16, #tpu.memory_space<vmem>>, vector<128x128xbf16>
    %cst_4 = arith.constant dense<0.000000e+00> : vector<128x128xf32>
    %7 = tpu.matmul %5, %6, %cst_4 {dimension_numbers = #tpu.dot_dimension_numbers<[1], [0], [0], [1], [0, 0, 1, 1], [], []>} : vector<128x128xbf16>, vector<128x128xbf16>, vector<128x128xf32> -> vector<128x128xf32>
    %c128_i32 = arith.constant 128 : i32
    %8 = arith.muli %arg1, %c128_i32 : i32
    %9 = tpu.iota {dimensions = array<i32: 1>} : vector<1x128xi32>
    %10 = vector.broadcast %8 : i32 to vector<1x128xi32>
    %11 = arith.addi %10, %9 : vector<1x128xi32>
    %c16_i32 = arith.constant 16 : i32
    %12 = vector.broadcast %c16_i32 : i32 to vector<1x128xi32>
    %13 = arith.cmpi slt, %11, %12 : vector<1x128xi32>
    %c0_5 = arith.constant 0 : index
    %c0_6 = arith.constant 0 : index
    %14 = vector.load %arg4[%c0_5, %c0_6] : memref<128x1xi32, #tpu.memory_space<vmem>>, vector<128x1xi32>
    %c0_7 = arith.constant 0 : index
    %c0_8 = arith.constant 0 : index
    %15 = vector.load %arg5[%c0_7, %c0_8] : memref<1x128xi32, #tpu.memory_space<vmem>>, vector<1x128xi32>
    %16 = vector.broadcast %14 : vector<128x1xi32> to vector<128x128xi32>
    %17 = vector.broadcast %15 : vector<1x128xi32> to vector<128x128xi32>
    %18 = arith.cmpi eq, %16, %17 : vector<128x128xi32>
    %c128_i32_9 = arith.constant 128 : i32
    %19 = arith.muli %arg0, %c128_i32_9 : i32
    %c1_i32 = arith.constant 1 : i32
    %20 = arith.addi %arg1, %c1_i32 : i32
    %c128_i32_10 = arith.constant 128 : i32
    %21 = arith.muli %20, %c128_i32_10 : i32
    %22 = arith.cmpi slt, %19, %21 : i32
    %c128_i32_11 = arith.constant 128 : i32
    %23 = arith.muli %arg1, %c128_i32_11 : i32
    %c1_i32_12 = arith.constant 1 : i32
    %24 = arith.addi %arg0, %c1_i32_12 : i32
    %c128_i32_13 = arith.constant 128 : i32
    %25 = arith.muli %24, %c128_i32_13 : i32
    %26 = arith.cmpi slt, %23, %25 : i32
    %27 = arith.andi %22, %26 : i1
    %28 = arith.extui %27 : i1 to i32
    %c0_i32_14 = arith.constant 0 : i32
    %29 = arith.cmpi ne, %28, %c0_i32_14 : i32
    %30:2 = scf.if %29 -> (vector<128x128xf32>, vector<128x128xf32>) {
      %c128_i32_37 = arith.constant 128 : i32
      %61 = arith.muli %arg0, %c128_i32_37 : i32
      %62 = tpu.iota {dimensions = array<i32: 0>} : vector<128x128xi32>
      %63 = vector.broadcast %61 : i32 to vector<128x128xi32>
      %64 = arith.addi %63, %62 : vector<128x128xi32>
      %65 = vector.broadcast %11 : vector<1x128xi32> to vector<128x128xi32>
      %66 = arith.cmpi ne, %64, %65 : vector<128x128xi32>
      %67 = vector.broadcast %13 : vector<1x128xi1> to vector<128x128xi1>
      %68 = arith.andi %66, %67 : vector<128x128xi1>
      %cst_38 = arith.constant -1.000000e+30 : f32
      %69 = vector.broadcast %cst_38 : f32 to vector<128x128xf32>
      %70 = arith.select %68, %7, %69 : vector<128x128xi1>, vector<128x128xf32>
      %71 = arith.andi %18, %68 : vector<128x128xi1>
      %cst_39 = arith.constant 1.000000e+00 : f32
      %cst_40 = arith.constant 0.000000e+00 : f32
      %72 = vector.broadcast %cst_39 : f32 to vector<128x128xf32>
      %73 = vector.broadcast %cst_40 : f32 to vector<128x128xf32>
      %74 = arith.select %71, %72, %73 : vector<128x128xi1>, vector<128x128xf32>
      scf.yield %70, %74 : vector<128x128xf32>, vector<128x128xf32>
    } else {
      %cst_37 = arith.constant -1.000000e+30 : f32
      %61 = vector.shape_cast %13 : vector<1x128xi1> to vector<1x128xi1>
      %62 = vector.broadcast %61 : vector<1x128xi1> to vector<128x128xi1>
      %63 = vector.broadcast %cst_37 : f32 to vector<128x128xf32>
      %64 = arith.select %62, %7, %63 : vector<128x128xi1>, vector<128x128xf32>
      %65 = vector.broadcast %13 : vector<1x128xi1> to vector<128x128xi1>
      %66 = arith.andi %18, %65 : vector<128x128xi1>
      %cst_38 = arith.constant 1.000000e+00 : f32
      %cst_39 = arith.constant 0.000000e+00 : f32
      %67 = vector.broadcast %cst_38 : f32 to vector<128x128xf32>
      %68 = vector.broadcast %cst_39 : f32 to vector<128x128xf32>
      %69 = arith.select %66, %67, %68 : vector<128x128xi1>, vector<128x128xf32>
      scf.yield %64, %69 : vector<128x128xf32>, vector<128x128xf32>
    }
    %c0_15 = arith.constant 0 : index
    %c0_16 = arith.constant 0 : index
    %31 = vector.load %arg7[%c0_15, %c0_16] : memref<128x1xf32, #tpu.memory_space<vmem>>, vector<128x1xf32>
    %cst_17 = arith.constant dense<0xFF800000> : vector<128xf32>
    %32 = vector.multi_reduction <maximumf>, %30#0, %cst_17 [1] : vector<128x128xf32> to vector<128xf32>
    %33 = vector.shape_cast %32 : vector<128xf32> to vector<128x1xf32>
    %34 = arith.maximumf %31, %33 : vector<128x1xf32>
    %35 = arith.subf %31, %34 : vector<128x1xf32>
    %36 = math.exp %35 : vector<128x1xf32>
    %37 = vector.broadcast %34 : vector<128x1xf32> to vector<128x128xf32>
    %38 = arith.subf %30#0, %37 : vector<128x128xf32>
    %39 = math.exp %38 : vector<128x128xf32>
    %c0_18 = arith.constant 0 : index
    %c0_19 = arith.constant 0 : index
    %40 = vector.load %arg8[%c0_18, %c0_19] : memref<128x1xf32, #tpu.memory_space<vmem>>, vector<128x1xf32>
    %41 = arith.mulf %36, %40 : vector<128x1xf32>
    %cst_20 = arith.constant dense<0.000000e+00> : vector<128xf32>
    %42 = vector.multi_reduction <add>, %39, %cst_20 [1] : vector<128x128xf32> to vector<128xf32>
    %43 = vector.shape_cast %42 : vector<128xf32> to vector<128x1xf32>
    %44 = arith.addf %41, %43 : vector<128x1xf32>
    %c0_21 = arith.constant 0 : index
    %c0_22 = arith.constant 0 : index
    %45 = vector.load %arg8[%c0_21, %c0_22] : memref<128x1xf32, #tpu.memory_space<vmem>>, vector<128x1xf32>
    tpu.vector_store %arg8[%c0_21, %c0_22], %44 {strides = array<i32>} : memref<128x1xf32, #tpu.memory_space<vmem>>, vector<128x1xf32>,
    %c0_23 = arith.constant 0 : index
    %c0_24 = arith.constant 0 : index
    %46 = vector.load %arg9[%c0_23, %c0_24] : memref<128x1xf32, #tpu.memory_space<vmem>>, vector<128x1xf32>
    %47 = arith.mulf %30#1, %7 : vector<128x128xf32>
    %cst_25 = arith.constant dense<0.000000e+00> : vector<128xf32>
    %48 = vector.multi_reduction <add>, %47, %cst_25 [1] : vector<128x128xf32> to vector<128xf32>
    %49 = vector.shape_cast %48 : vector<128xf32> to vector<128x1xf32>
    %50 = arith.addf %46, %49 : vector<128x1xf32>
    %c0_26 = arith.constant 0 : index
    %c0_27 = arith.constant 0 : index
    %51 = vector.load %arg9[%c0_26, %c0_27] : memref<128x1xf32, #tpu.memory_space<vmem>>, vector<128x1xf32>
    tpu.vector_store %arg9[%c0_26, %c0_27], %50 {strides = array<i32>} : memref<128x1xf32, #tpu.memory_space<vmem>>, vector<128x1xf32>,
    %c0_28 = arith.constant 0 : index
    %c0_29 = arith.constant 0 : index
    %52 = vector.load %arg10[%c0_28, %c0_29] : memref<128x1xf32, #tpu.memory_space<vmem>>, vector<128x1xf32>
    %cst_30 = arith.constant dense<0.000000e+00> : vector<128xf32>
    %53 = vector.multi_reduction <add>, %30#1, %cst_30 [1] : vector<128x128xf32> to vector<128xf32>
    %54 = vector.shape_cast %53 : vector<128xf32> to vector<128x1xf32>
    %55 = arith.addf %52, %54 : vector<128x1xf32>
    %c0_31 = arith.constant 0 : index
    %c0_32 = arith.constant 0 : index
    %56 = vector.load %arg10[%c0_31, %c0_32] : memref<128x1xf32, #tpu.memory_space<vmem>>, vector<128x1xf32>
    tpu.vector_store %arg10[%c0_31, %c0_32], %55 {strides = array<i32>} : memref<128x1xf32, #tpu.memory_space<vmem>>, vector<128x1xf32>,
    %c0_33 = arith.constant 0 : index
    %c0_34 = arith.constant 0 : index
    %57 = vector.load %arg7[%c0_33, %c0_34] : memref<128x1xf32, #tpu.memory_space<vmem>>, vector<128x1xf32>
    tpu.vector_store %arg7[%c0_33, %c0_34], %34 {strides = array<i32>} : memref<128x1xf32, #tpu.memory_space<vmem>>, vector<128x1xf32>,
    %c0_i32_35 = arith.constant 0 : i32
    %58 = arith.cmpi eq, %arg1, %c0_i32_35 : i32
    %59 = arith.extui %58 : i1 to i32
    %c0_i32_36 = arith.constant 0 : i32
    %60 = arith.cmpi ne, %59, %c0_i32_36 : i32
    scf.if %60 {
      %c0_37 = arith.constant 0 : index
      %c0_38 = arith.constant 0 : index
      %61 = vector.load %arg7[%c0_37, %c0_38] : memref<128x1xf32, #tpu.memory_space<vmem>>, vector<128x1xf32>
      %c0_39 = arith.constant 0 : index
      %c0_40 = arith.constant 0 : index
      %62 = vector.load %arg8[%c0_39, %c0_40] : memref<128x1xf32, #tpu.memory_space<vmem>>, vector<128x1xf32>
      %63 = math.log %62 : vector<128x1xf32>
      %64 = arith.addf %61, %63 : vector<128x1xf32>
      %c0_41 = arith.constant 0 : index
      %c0_42 = arith.constant 0 : index
      %65 = vector.load %arg10[%c0_41, %c0_42] : memref<128x1xf32, #tpu.memory_space<vmem>>, vector<128x1xf32>
      %c0_43 = arith.constant 0 : index
      %c0_44 = arith.constant 0 : index
      %66 = vector.load %arg9[%c0_43, %c0_44] : memref<128x1xf32, #tpu.memory_space<vmem>>, vector<128x1xf32>
      %67 = arith.mulf %65, %64 : vector<128x1xf32>
      %68 = arith.subf %66, %67 : vector<128x1xf32>
      %cst_45 = arith.constant 9.99999997E-7 : f32
      %69 = vector.broadcast %cst_45 : f32 to vector<128x1xf32>
      %70 = arith.addf %65, %69 : vector<128x1xf32>
      %71 = arith.divf %68, %70 : vector<128x1xf32>
      %cst_46 = arith.constant -1.000000e+00 : f32
      %72 = vector.broadcast %cst_46 : f32 to vector<128x1xf32>
      %73 = arith.mulf %72, %71 : vector<128x1xf32>
      %c128_i32_47 = arith.constant 128 : i32
      %74 = arith.muli %arg0, %c128_i32_47 : i32
      %75 = tpu.iota {dimensions = array<i32: 0>} : vector<128x1xi32>
      %76 = vector.broadcast %74 : i32 to vector<128x1xi32>
      %77 = arith.addi %76, %75 : vector<128x1xi32>
      %c16_i32_48 = arith.constant 16 : i32
      %78 = vector.broadcast %c16_i32_48 : i32 to vector<128x1xi32>
      %79 = arith.cmpi slt, %77, %78 : vector<128x1xi32>
      %cst_49 = arith.constant 0.000000e+00 : f32
      %80 = vector.broadcast %cst_49 : f32 to vector<128x1xf32>
      %81 = arith.select %79, %73, %80 : vector<128x1xi1>, vector<128x1xf32>
      %82 = vector.shape_cast %81 : vector<128x1xf32> to vector<1x128x1xf32>
      %cst_50 = arith.constant dense<0.000000e+00> : vector<1xf32>
      %83 = vector.multi_reduction <add>, %82, %cst_50 [1, 2] : vector<1x128x1xf32> to vector<1xf32>
      %84 = vector.shape_cast %83 : vector<1xf32> to vector<1x1x1xf32>
      %85 = vector.extract %84[0, 0, 0] : f32 from vector<1x1x1xf32>
      %86 = vector.broadcast %85 : f32 to vector<1x8x128xf32>
      %c0_51 = arith.constant 0 : index
      %c0_52 = arith.constant 0 : index
      %c0_53 = arith.constant 0 : index
      %87 = vector.load %arg6[%c0_51, %c0_52, %c0_53] : memref<1x8x128xf32, #tpu.memory_space<vmem>>, vector<1x8x128xf32>
      tpu.vector_store %arg6[%c0_51, %c0_52, %c0_53], %86 {strides = array<i32>} : memref<1x8x128xf32, #tpu.memory_space<vmem>>, vector<1x8x128xf32>,
    } else {
    }
    return
  }
  func.func @transform_0(%arg0: i32, %arg1: i32) -> (i32, i32) {
    %c0_i32 = arith.constant 0 : i32
    %c0_i32_0 = arith.constant 0 : i32
    return %arg0, %c0_i32 : i32, i32
  }
  func.func @transform_1(%arg0: i32, %arg1: i32) -> (i32, i32) {
    %c0_i32 = arith.constant 0 : i32
    %c0_i32_0 = arith.constant 0 : i32
    return %c0_i32, %arg1 : i32, i32
  }
  func.func @transform_2(%arg0: i32, %arg1: i32) -> (i32, i32) {
    %c0_i32 = arith.constant 0 : i32
    %c0_i32_0 = arith.constant 0 : i32
    return %arg0, %c0_i32 : i32, i32
  }
  func.func @transform_3(%arg0: i32, %arg1: i32) -> (i32, i32) {
    %c0_i32 = arith.constant 0 : i32
    %c0_i32_0 = arith.constant 0 : i32
    return %c0_i32, %arg1 : i32, i32
  }
  func.func @transform_4(%arg0: i32, %arg1: i32) -> (i32, i32, i32) {
    %c0_i32 = arith.constant 0 : i32
    %c0_i32_0 = arith.constant 0 : i32
    %c0_i32_1 = arith.constant 0 : i32
    return %arg0, %c0_i32, %c0_i32_0 : i32, i32, i32
  }
}

</mosaic_0001>

<llo_original>
// kernel: tpu_custom_call.1
$region0: #{tpu_custom_call.1}
  #allocation0 [shape = 'u32[]', space=smem, size = 0x4, offset = 0x4, fixed_abs, tag = 'smem constant byte address 0x4 - core index']
  #allocation1 [shape = 'u32[144,128]{1,0:T(1,128)}', space=vmem, size = 0x12000, scoped, tag = 'internal scratch']
  #allocation2 [shape = 'f32[128,1]{1,0:T(8,128)}', space=vmem, size = 0x10000, scoped, tag = 'scratch operand']
  #allocation3 [shape = 'f32[128,1]{1,0:T(8,128)}', space=vmem, size = 0x10000, scoped, tag = 'scratch operand']
  #allocation4 [shape = 'f32[128,1]{1,0:T(8,128)}', space=vmem, size = 0x10000, scoped, tag = 'scratch operand']
  #allocation5 [shape = 'f32[128,1]{1,0:T(8,128)}', space=vmem, size = 0x10000, scoped, tag = 'scratch operand']
  %s0 = inlined_call_operand.vmem [shape: bf16[128,128], index: 0, kind: input, shape index: {}]
  %s1 = inlined_call_operand.vmem [shape: bf16[128,128], index: 1, kind: input, shape index: {}]
  %s2 = inlined_call_operand.vmem [shape: s32[128,1], index: 2, kind: input, shape index: {}]
  %s3 = inlined_call_operand.vmem [shape: s32[1,128], index: 3, kind: input, shape index: {}]
  %s4 = inlined_call_operand.hbm [shape: f32[1,8,128], index: 4, kind: output, shape index: {}]
  %s5 = sld [smem:[#allocation0]]
  $region42: #{tpu_custom_call.1} parent=0
    _
  %s7 = ssub.s32 1, %s5
  %s8 = scalar_select 0, %s7, %s5
  $region1: #{tpu_custom_call.1} parent=0
    #allocation6 [shape = 'u8[4096]{0}', space=vmem, size = 0x1000, scoped, tag = 'output window, operand 0, single buffered']
    #allocation7 [shape = 's32[1]{0}', space=sflag, size = 0x4, scoped, tag = 'scoped memory for tpu_custom_call.1']
    %9 = vsyncpa [#allocation7], 0
    // Predicated region
    $region2: #{tpu_custom_call.1} parent=1 // pred_check
      _
    $region3: #{tpu_custom_call.1} parent=1 // pred_check_branch
      %11 = sbr.rel (0) target = $region5
    $region4: #{tpu_custom_call.1} parent=1 // pred_region
      _
    $region5: #{tpu_custom_call.1} parent=1 // pred_fallthru
      _
    // Predicated region
    $region6: #{tpu_custom_call.1} parent=1 // pred_check
      _
    $region7: #{tpu_custom_call.1} parent=1 // pred_check_branch
      %13 = sbr.rel (0) target = $region9
    $region8: #{tpu_custom_call.1} parent=1 // pred_region
      _
    $region9: #{tpu_custom_call.1} parent=1 // pred_fallthru
      _
    // Predicated region
    $region10: #{tpu_custom_call.1} parent=1 // pred_check
      _
    $region11: #{tpu_custom_call.1} parent=1 // pred_check_branch
      %15 = sbr.rel (0) target = $region13
    $region12: #{tpu_custom_call.1} parent=1 // pred_region
      _
    $region13: #{tpu_custom_call.1} parent=1 // pred_fallthru
      _
    // Predicated region
    $region14: #{tpu_custom_call.1} parent=1 // pred_check
      _
    $region15: #{tpu_custom_call.1} parent=1 // pred_check_branch
      %17 = sbr.rel (0) target = $region17
    $region16: #{tpu_custom_call.1} parent=1 // pred_region
      _
    $region17: #{tpu_custom_call.1} parent=1 // pred_fallthru
      _
    %p19 = scmp.eq.s32.totalorder 0, 0
    // Predicated region
    $region18: #{tpu_custom_call.1} parent=1 // pred_check
      %p20 = pneg %p19
    $region19: #{tpu_custom_call.1} parent=1 // pred_check_branch
      %22 = sbr.rel (%p20) target = $region21
    $region20: #{tpu_custom_call.1} parent=1 // pred_region
      %vm23 = vcmask 7168
      %24 = vst.msk [vmem:[#allocation2] sm:$0xff] %vm23, -1e+30
      %25 = vst.msk [vmem:[#allocation2 + $0x8] sm:$0xff] %vm23, -1e+30
      %26 = vst.msk [vmem:[#allocation2 + $0x10] sm:$0xff] %vm23, -1e+30
      %27 = vst.msk [vmem:[#allocation2 + $0x18] sm:$0xff] %vm23, -1e+30
      %28 = vst.msk [vmem:[#allocation2 + $0x20] sm:$0xff] %vm23, -1e+30
      %29 = vst.msk [vmem:[#allocation2 + $0x28] sm:$0xff] %vm23, -1e+30
      %30 = vst.msk [vmem:[#allocation2 + $0x30] sm:$0xff] %vm23, -1e+30
      %31 = vst.msk [vmem:[#allocation2 + $0x38] sm:$0xff] %vm23, -1e+30
      %32 = vst.msk [vmem:[#allocation2 + $0x40] sm:$0xff] %vm23, -1e+30
      %33 = vst.msk [vmem:[#allocation2 + $0x48] sm:$0xff] %vm23, -1e+30
      %34 = vst.msk [vmem:[#allocation2 + $0x50] sm:$0xff] %vm23, -1e+30
      %35 = vst.msk [vmem:[#allocation2 + $0x58] sm:$0xff] %vm23, -1e+30
      %36 = vst.msk [vmem:[#allocation2 + $0x60] sm:$0xff] %vm23, -1e+30
      %37 = vst.msk [vmem:[#allocation2 + $0x68] sm:$0xff] %vm23, -1e+30
      %38 = vst.msk [vmem:[#allocation2 + $0x70] sm:$0xff] %vm23, -1e+30
      %39 = vst.msk [vmem:[#allocation2 + $0x78] sm:$0xff] %vm23, -1e+30
      %40 = vst.msk [vmem:[#allocation3] sm:$0xff] %vm23, 0.0
      %41 = vst.msk [vmem:[#allocation3 + $0x8] sm:$0xff] %vm23, 0.0
      %42 = vst.msk [vmem:[#allocation3 + $0x10] sm:$0xff] %vm23, 0.0
      %43 = vst.msk [vmem:[#allocation3 + $0x18] sm:$0xff] %vm23, 0.0
      %44 = vst.msk [vmem:[#allocation3 + $0x20] sm:$0xff] %vm23, 0.0
      %45 = vst.msk [vmem:[#allocation3 + $0x28] sm:$0xff] %vm23, 0.0
      %46 = vst.msk [vmem:[#allocation3 + $0x30] sm:$0xff] %vm23, 0.0
      %47 = vst.msk [vmem:[#allocation3 + $0x38] sm:$0xff] %vm23, 0.0
      %48 = vst.msk [vmem:[#allocation3 + $0x40] sm:$0xff] %vm23, 0.0
      %49 = vst.msk [vmem:[#allocation3 + $0x48] sm:$0xff] %vm23, 0.0
      %50 = vst.msk [vmem:[#allocation3 + $0x50] sm:$0xff] %vm23, 0.0
      %51 = vst.msk [vmem:[#allocation3 + $0x58] sm:$0xff] %vm23, 0.0
      %52 = vst.msk [vmem:[#allocation3 + $0x60] sm:$0xff] %vm23, 0.0
      %53 = vst.msk [vmem:[#allocation3 + $0x68] sm:$0xff] %vm23, 0.0
      %54 = vst.msk [vmem:[#allocation3 + $0x70] sm:$0xff] %vm23, 0.0
      %55 = vst.msk [vmem:[#allocation3 + $0x78] sm:$0xff] %vm23, 0.0
      %56 = vst.msk [vmem:[#allocation4] sm:$0xff] %vm23, 0.0
      %57 = vst.msk [vmem:[#allocation4 + $0x8] sm:$0xff] %vm23, 0.0
      %58 = vst.msk [vmem:[#allocation4 + $0x10] sm:$0xff] %vm23, 0.0
      %59 = vst.msk [vmem:[#allocation4 + $0x18] sm:$0xff] %vm23, 0.0
      %60 = vst.msk [vmem:[#allocation4 + $0x20] sm:$0xff] %vm23, 0.0
      %61 = vst.msk [vmem:[#allocation4 + $0x28] sm:$0xff] %vm23, 0.0
      %62 = vst.msk [vmem:[#allocation4 + $0x30] sm:$0xff] %vm23, 0.0
      %63 = vst.msk [vmem:[#allocation4 + $0x38] sm:$0xff] %vm23, 0.0
      %64 = vst.msk [vmem:[#allocation4 + $0x40] sm:$0xff] %vm23, 0.0
      %65 = vst.msk [vmem:[#allocation4 + $0x48] sm:$0xff] %vm23, 0.0
      %66 = vst.msk [vmem:[#allocation4 + $0x50] sm:$0xff] %vm23, 0.0
      %67 = vst.msk [vmem:[#allocation4 + $0x58] sm:$0xff] %vm23, 0.0
      %68 = vst.msk [vmem:[#allocation4 + $0x60] sm:$0xff] %vm23, 0.0
      %69 = vst.msk [vmem:[#allocation4 + $0x68] sm:$0xff] %vm23, 0.0
      %70 = vst.msk [vmem:[#allocation4 + $0x70] sm:$0xff] %vm23, 0.0
      %71 = vst.msk [vmem:[#allocation4 + $0x78] sm:$0xff] %vm23, 0.0
      %72 = vst.msk [vmem:[#allocation5] sm:$0xff] %vm23, 0.0
      %73 = vst.msk [vmem:[#allocation5 + $0x8] sm:$0xff] %vm23, 0.0
      %74 = vst.msk [vmem:[#allocation5 + $0x10] sm:$0xff] %vm23, 0.0
      %75 = vst.msk [vmem:[#allocation5 + $0x18] sm:$0xff] %vm23, 0.0
      %76 = vst.msk [vmem:[#allocation5 + $0x20] sm:$0xff] %vm23, 0.0
      %77 = vst.msk [vmem:[#allocation5 + $0x28] sm:$0xff] %vm23, 0.0
      %78 = vst.msk [vmem:[#allocation5 + $0x30] sm:$0xff] %vm23, 0.0
      %79 = vst.msk [vmem:[#allocation5 + $0x38] sm:$0xff] %vm23, 0.0
      %80 = vst.msk [vmem:[#allocation5 + $0x40] sm:$0xff] %vm23, 0.0
      %81 = vst.msk [vmem:[#allocation5 + $0x48] sm:$0xff] %vm23, 0.0
      %82 = vst.msk [vmem:[#allocation5 + $0x50] sm:$0xff] %vm23, 0.0
      %83 = vst.msk [vmem:[#allocation5 + $0x58] sm:$0xff] %vm23, 0.0
      %84 = vst.msk [vmem:[#allocation5 + $0x60] sm:$0xff] %vm23, 0.0
      %85 = vst.msk [vmem:[#allocation5 + $0x68] sm:$0xff] %vm23, 0.0
      %86 = vst.msk [vmem:[#allocation5 + $0x70] sm:$0xff] %vm23, 0.0
      %87 = vst.msk [vmem:[#allocation5 + $0x78] sm:$0xff] %vm23, 0.0
    $region21: #{tpu_custom_call.1} parent=1 // pred_fallthru
      _
    %v88 = vld [vmem:[%s0] sm:$0xf]
    %v89 = vld [vmem:[%s0 + $0x4] sm:$0xf]
    %v90 = vld [vmem:[%s0 + $0x8] sm:$0xf]
    %v91 = vld [vmem:[%s0 + $0xc] sm:$0xf]
    %v92 = vld [vmem:[%s0 + $0x10] sm:$0xf]
    %v93 = vld [vmem:[%s0 + $0x14] sm:$0xf]
    %v94 = vld [vmem:[%s0 + $0x18] sm:$0xf]
    %v95 = vld [vmem:[%s0 + $0x1c] sm:$0xf]
    %v96 = vld [vmem:[%s0 + $0x20] sm:$0xf]
    %v97 = vld [vmem:[%s0 + $0x24] sm:$0xf]
    %v98 = vld [vmem:[%s0 + $0x28] sm:$0xf]
    %v99 = vld [vmem:[%s0 + $0x2c] sm:$0xf]
    %v100 = vld [vmem:[%s0 + $0x30] sm:$0xf]
    %v101 = vld [vmem:[%s0 + $0x34] sm:$0xf]
    %v102 = vld [vmem:[%s0 + $0x38] sm:$0xf]
    %v103 = vld [vmem:[%s0 + $0x3c] sm:$0xf]
    %v104 = vld [vmem:[%s1] sm:$0xf]
    %v105 = vld [vmem:[%s1 + $0x4] sm:$0xf]
    %v106 = vld [vmem:[%s1 + $0x8] sm:$0xf]
    %v107 = vld [vmem:[%s1 + $0xc] sm:$0xf]
    %v108 = vld [vmem:[%s1 + $0x10] sm:$0xf]
    %v109 = vld [vmem:[%s1 + $0x14] sm:$0xf]
    %v110 = vld [vmem:[%s1 + $0x18] sm:$0xf]
    %v111 = vld [vmem:[%s1 + $0x1c] sm:$0xf]
    %v112 = vld [vmem:[%s1 + $0x20] sm:$0xf]
    %v113 = vld [vmem:[%s1 + $0x24] sm:$0xf]
    %v114 = vld [vmem:[%s1 + $0x28] sm:$0xf]
    %v115 = vld [vmem:[%s1 + $0x2c] sm:$0xf]
    %v116 = vld [vmem:[%s1 + $0x30] sm:$0xf]
    %v117 = vld [vmem:[%s1 + $0x34] sm:$0xf]
    %v118 = vld [vmem:[%s1 + $0x38] sm:$0xf]
    %v119 = vld [vmem:[%s1 + $0x3c] sm:$0xf]
    %v136 = vunpack.c.l.b16 %v88
    %v137 = vunpack.c.l.b16 %v89
    %v138 = vunpack.c.l.b16 %v90
    %v139 = vunpack.c.l.b16 %v91
    %v140 = vunpack.c.l.b16 %v92
    %v141 = vunpack.c.l.b16 %v93
    %v142 = vunpack.c.l.b16 %v94
    %v143 = vunpack.c.l.b16 %v95
    %v144 = vunpack.c.l.b16 %v96
    %v145 = vunpack.c.l.b16 %v97
    %v146 = vunpack.c.l.b16 %v98
    %v147 = vunpack.c.l.b16 %v99
    %v148 = vunpack.c.l.b16 %v100
    %v149 = vunpack.c.l.b16 %v101
    %v150 = vunpack.c.l.b16 %v102
    %v151 = vunpack.c.l.b16 %v103
    %v152 = vpack.c.b16 %v137, %v136
    %v153 = vpack.c.b16 %v139, %v138
    %v154 = vpack.c.b16 %v141, %v140
    %v155 = vpack.c.b16 %v143, %v142
    %v156 = vpack.c.b16 %v145, %v144
    %v157 = vpack.c.b16 %v147, %v146
    %v158 = vpack.c.b16 %v149, %v148
    %v159 = vpack.c.b16 %v151, %v150
    %v184 = vunpack.c.l.b16 %v104
    %v185 = vunpack.c.l.b16 %v105
    %v186 = vunpack.c.l.b16 %v106
    %v187 = vunpack.c.l.b16 %v107
    %v188 = vunpack.c.l.b16 %v108
    %v189 = vunpack.c.l.b16 %v109
    %v190 = vunpack.c.l.b16 %v110
    %v191 = vunpack.c.l.b16 %v111
    %v192 = vunpack.c.l.b16 %v112
    %v193 = vunpack.c.l.b16 %v113
    %v194 = vunpack.c.l.b16 %v114
    %v195 = vunpack.c.l.b16 %v115
    %v196 = vunpack.c.l.b16 %v116
    %v197 = vunpack.c.l.b16 %v117
    %v198 = vunpack.c.l.b16 %v118
    %v199 = vunpack.c.l.b16 %v119
    %v200 = vpack.c.b16 %v185, %v184
    %v201 = vpack.c.b16 %v187, %v186
    %v202 = vpack.c.b16 %v189, %v188
    %v203 = vpack.c.b16 %v191, %v190
    %v204 = vpack.c.b16 %v193, %v192
    %v205 = vpack.c.b16 %v195, %v194
    %v206 = vpack.c.b16 %v197, %v196
    %v207 = vpack.c.b16 %v199, %v198
    %216 = vmatprep.subr.bf16.mxu0 0
    %217 = vmatpush1.bf16.msra.mxu0 %v200
    %218 = vmatprep.subr.bf16.mxu0 0
    %219 = vmatpush1.bf16.msra.mxu0 %v201
    %220 = vmatprep.subr.bf16.mxu0 0
    %221 = vmatpush1.bf16.msra.mxu0 %v202
    %222 = vmatprep.subr.bf16.mxu0 0
    %223 = vmatpush1.bf16.msra.mxu0 %v203
    %224 = vmatprep.subr.bf16.mxu0 0
    %225 = vmatpush1.bf16.msra.mxu0 %v204
    %226 = vmatprep.subr.bf16.mxu0 0
    %227 = vmatpush1.bf16.msra.mxu0 %v205
    %228 = vmatprep.subr.bf16.mxu0 0
    %229 = vmatpush1.bf16.msra.mxu0 %v206
    %230 = vmatprep.subr.bf16.mxu0 0
    %231 = vmatpush1.bf16.msra.mxu0 %v207
    %232 = vmatprep.subr.bf16.mxu0 0
    %233 = vmatpush1.bf16.msra.mxu0 0
    %234 = vmatprep.subr.bf16.mxu0 0
    %235 = vmatpush1.bf16.msra.mxu0 0
    %236 = vmatprep.subr.bf16.mxu0 0
    %237 = vmatpush1.bf16.msra.mxu0 0
    %238 = vmatprep.subr.bf16.mxu0 0
    %239 = vmatpush1.bf16.msra.mxu0 0
    %240 = vmatprep.subr.bf16.mxu0 0
    %241 = vmatpush1.bf16.msra.mxu0 0
    %242 = vmatprep.subr.bf16.mxu0 0
    %243 = vmatpush1.bf16.msra.mxu0 0
    %244 = vmatprep.subr.bf16.mxu0 0
    %245 = vmatpush1.bf16.msra.mxu0 0
    %246 = vmatprep.subr.bf16.mxu0 0
    %247 = vmatpush1.bf16.msra.mxu0 0
    %248 = vmatprep.mubr.bf16.mxu0 0
    %249 = vmatmul.mubr.bf16.gmra.mrb[0].mxu0 %v152
    %v250 = vpop.f32.mrb[0].mxu0
    %v251 = vadd.f32 0.0, %v250
    %v252 = vpop.f32.mrb[0].mxu0
    %v253 = vpop.f32.mrb[0].mxu0
    %v254 = vadd.f32 0.0, %v253
    %v255 = vpop.f32.mrb[0].mxu0
    %256 = vmatprep.mubr.bf16.mxu0 0
    %257 = vmatmul.mubr.bf16.gmra.mrb[0].mxu0 %v153
    %v258 = vpop.f32.mrb[0].mxu0
    %v259 = vadd.f32 0.0, %v258
    %v260 = vpop.f32.mrb[0].mxu0
    %v261 = vpop.f32.mrb[0].mxu0
    %v262 = vadd.f32 0.0, %v261
    %v263 = vpop.f32.mrb[0].mxu0
    %264 = vmatprep.mubr.bf16.mxu0 0
    %265 = vmatmul.mubr.bf16.gmra.mrb[0].mxu0 %v154
    %v266 = vpop.f32.mrb[0].mxu0
    %v267 = vadd.f32 0.0, %v266
    %v268 = vpop.f32.mrb[0].mxu0
    %v269 = vpop.f32.mrb[0].mxu0
    %v270 = vadd.f32 0.0, %v269
    %v271 = vpop.f32.mrb[0].mxu0
    %272 = vmatprep.mubr.bf16.mxu0 0
    %273 = vmatmul.mubr.bf16.gmra.mrb[0].mxu0 %v155
    %v274 = vpop.f32.mrb[0].mxu0
    %v275 = vadd.f32 0.0, %v274
    %v276 = vpop.f32.mrb[0].mxu0
    %v277 = vpop.f32.mrb[0].mxu0
    %v278 = vadd.f32 0.0, %v277
    %v279 = vpop.f32.mrb[0].mxu0
    %280 = vmatprep.mubr.bf16.mxu0 0
    %281 = vmatmul.mubr.bf16.gmra.mrb[0].mxu0 %v156
    %v282 = vpop.f32.mrb[0].mxu0
    %v283 = vadd.f32 0.0, %v282
    %v284 = vpop.f32.mrb[0].mxu0
    %v285 = vpop.f32.mrb[0].mxu0
    %v286 = vadd.f32 0.0, %v285
    %v287 = vpop.f32.mrb[0].mxu0
    %288 = vmatprep.mubr.bf16.mxu0 0
    %289 = vmatmul.mubr.bf16.gmra.mrb[0].mxu0 %v157
    %v290 = vpop.f32.mrb[0].mxu0
    %v291 = vadd.f32 0.0, %v290
    %v292 = vpop.f32.mrb[0].mxu0
    %v293 = vpop.f32.mrb[0].mxu0
    %v294 = vadd.f32 0.0, %v293
    %v295 = vpop.f32.mrb[0].mxu0
    %296 = vmatprep.mubr.bf16.mxu0 0
    %297 = vmatmul.mubr.bf16.gmra.mrb[0].mxu0 %v158
    %v298 = vpop.f32.mrb[0].mxu0
    %v299 = vadd.f32 0.0, %v298
    %v300 = vpop.f32.mrb[0].mxu0
    %v301 = vpop.f32.mrb[0].mxu0
    %v302 = vadd.f32 0.0, %v301
    %v303 = vpop.f32.mrb[0].mxu0
    %304 = vmatprep.mubr.bf16.mxu0 0
    %305 = vmatmul.mubr.bf16.gmra.mrb[0].mxu0 %v159
    %v306 = vpop.f32.mrb[0].mxu0
    %v307 = vadd.f32 0.0, %v306
    %v308 = vpop.f32.mrb[0].mxu0
    %v309 = vpop.f32.mrb[0].mxu0
    %v310 = vadd.f32 0.0, %v309
    %v311 = vpop.f32.mrb[0].mxu0
    %312 = vdwg.mxu0
    %s313 = smul.u32 0, 128
    %v314 = vlaneseq
    %v315 = vand.u32 %v314, 127
    %v316 = vstv %s313
    %v317 = vadd.s32 %v316, %v315
    %vm318 = vcmp.lt.s32.totalorder %v317, 16
    %v319 = vld [vmem:[%s2] sm:$0xff]
    %v320 = vld [vmem:[%s2 + $0x8] sm:$0xff]
    %v321 = vld [vmem:[%s2 + $0x10] sm:$0xff]
    %v322 = vld [vmem:[%s2 + $0x18] sm:$0xff]
    %v323 = vld [vmem:[%s2 + $0x20] sm:$0xff]
    %v324 = vld [vmem:[%s2 + $0x28] sm:$0xff]
    %v325 = vld [vmem:[%s2 + $0x30] sm:$0xff]
    %v326 = vld [vmem:[%s2 + $0x38] sm:$0xff]
    %v327 = vld [vmem:[%s2 + $0x40] sm:$0xff]
    %v328 = vld [vmem:[%s2 + $0x48] sm:$0xff]
    %v329 = vld [vmem:[%s2 + $0x50] sm:$0xff]
    %v330 = vld [vmem:[%s2 + $0x58] sm:$0xff]
    %v331 = vld [vmem:[%s2 + $0x60] sm:$0xff]
    %v332 = vld [vmem:[%s2 + $0x68] sm:$0xff]
    %v333 = vld [vmem:[%s2 + $0x70] sm:$0xff]
    %v334 = vld [vmem:[%s2 + $0x78] sm:$0xff]
    %v335 = vld [vmem:[%s3] sm:$0x1]
    %336 = vset.pattern.permute.xlu0 0
    %337 = vperm.xlu0 %336, %v319
    %v338 = vpop.permute.xlu0 %337
    %339 = vset.pattern.permute.xlu0 0
    %340 = vperm.xlu0 %339, %v320
    %v341 = vpop.permute.xlu0 %340
    %342 = vset.pattern.permute.xlu0 0
    %343 = vperm.xlu0 %342, %v321
    %v344 = vpop.permute.xlu0 %343
    %345 = vset.pattern.permute.xlu0 0
    %346 = vperm.xlu0 %345, %v322
    %v347 = vpop.permute.xlu0 %346
    %348 = vset.pattern.permute.xlu0 0
    %349 = vperm.xlu0 %348, %v323
    %v350 = vpop.permute.xlu0 %349
    %351 = vset.pattern.permute.xlu0 0
    %352 = vperm.xlu0 %351, %v324
    %v353 = vpop.permute.xlu0 %352
    %354 = vset.pattern.permute.xlu0 0
    %355 = vperm.xlu0 %354, %v325
    %v356 = vpop.permute.xlu0 %355
    %357 = vset.pattern.permute.xlu0 0
    %358 = vperm.xlu0 %357, %v326
    %v359 = vpop.permute.xlu0 %358
    %360 = vset.pattern.permute.xlu0 0
    %361 = vperm.xlu0 %360, %v327
    %v362 = vpop.permute.xlu0 %361
    %363 = vset.pattern.permute.xlu0 0
    %364 = vperm.xlu0 %363, %v328
    %v365 = vpop.permute.xlu0 %364
    %366 = vset.pattern.permute.xlu0 0
    %367 = vperm.xlu0 %366, %v329
    %v368 = vpop.permute.xlu0 %367
    %369 = vset.pattern.permute.xlu0 0
    %370 = vperm.xlu0 %369, %v330
    %v371 = vpop.permute.xlu0 %370
    %372 = vset.pattern.permute.xlu0 0
    %373 = vperm.xlu0 %372, %v331
    %v374 = vpop.permute.xlu0 %373
    %375 = vset.pattern.permute.xlu0 0
    %376 = vperm.xlu0 %375, %v332
    %v377 = vpop.permute.xlu0 %376
    %378 = vset.pattern.permute.xlu0 0
    %379 = vperm.xlu0 %378, %v333
    %v380 = vpop.permute.xlu0 %379
    %381 = vset.pattern.permute.xlu0 0
    %382 = vperm.xlu0 %381, %v334
    %v383 = vpop.permute.xlu0 %382
    %v384 = vlaneseq
    %v385 = vshrl.u32 %v384, 7
    %v386 = vsub.s32 0, %v385
    %v387 = vrot.slane %v335, %v386
    %vm388 = vcmp.eq.s32.totalorder %v338, %v387
    %vm389 = vcmp.eq.s32.totalorder %v341, %v387
    %vm390 = vcmp.eq.s32.totalorder %v344, %v387
    %vm391 = vcmp.eq.s32.totalorder %v347, %v387
    %vm392 = vcmp.eq.s32.totalorder %v350, %v387
    %vm393 = vcmp.eq.s32.totalorder %v353, %v387
    %vm394 = vcmp.eq.s32.totalorder %v356, %v387
    %vm395 = vcmp.eq.s32.totalorder %v359, %v387
    %vm396 = vcmp.eq.s32.totalorder %v362, %v387
    %vm397 = vcmp.eq.s32.totalorder %v365, %v387
    %vm398 = vcmp.eq.s32.totalorder %v368, %v387
    %vm399 = vcmp.eq.s32.totalorder %v371, %v387
    %vm400 = vcmp.eq.s32.totalorder %v374, %v387
    %vm401 = vcmp.eq.s32.totalorder %v377, %v387
    %vm402 = vcmp.eq.s32.totalorder %v380, %v387
    %vm403 = vcmp.eq.s32.totalorder %v383, %v387
    %s404 = smul.u32 0, 128
    %s405 = sadd.s32 0, 1
    %s406 = smul.u32 %s405, 128
    %p407 = scmp.lt.s32.totalorder %s404, %s406
    %s408 = sadd.s32 0, 1
    %s409 = smul.u32 %s408, 128
    %p410 = scmp.lt.s32.totalorder %s313, %s409
    %p411 = pnand %p407, %p410
    %p412 = pneg %p411
    // Predicated region
    $region22: #{tpu_custom_call.1} parent=1 // pred_check
      _
    $region23: #{tpu_custom_call.1} parent=1 // pred_check_branch
      %414 = sbr.rel (%p411) target = $region25
    $region24: #{tpu_custom_call.1} parent=1 // pred_region
      %v415 = vlaneseq
      %v416 = vshrl.u32 %v415, 7
      %v417 = vadd.s32 %v416, 8
      %v418 = vadd.s32 %v416, 16
      %v419 = vadd.s32 %v416, 24
      %v420 = vadd.s32 %v416, 32
      %v421 = vadd.s32 %v416, 40
      %v422 = vadd.s32 %v416, 48
      %v423 = vadd.s32 %v416, 56
      %v424 = vadd.s32 %v416, 64
      %v425 = vadd.s32 %v416, 72
      %v426 = vadd.s32 %v416, 80
      %v427 = vadd.s32 %v416, 88
      %v428 = vadd.s32 %v416, 96
      %v429 = vadd.s32 %v416, 104
      %v430 = vadd.s32 %v416, 112
      %v431 = vadd.s32 %v416, 120
      %v432 = vstv %s404
      %v433 = vadd.s32 %v432, %v416
      %v434 = vadd.s32 %v432, %v417
      %v435 = vadd.s32 %v432, %v418
      %v436 = vadd.s32 %v432, %v419
      %v437 = vadd.s32 %v432, %v420
      %v438 = vadd.s32 %v432, %v421
      %v439 = vadd.s32 %v432, %v422
      %v440 = vadd.s32 %v432, %v423
      %v441 = vadd.s32 %v432, %v424
      %v442 = vadd.s32 %v432, %v425
      %v443 = vadd.s32 %v432, %v426
      %v444 = vadd.s32 %v432, %v427
      %v445 = vadd.s32 %v432, %v428
      %v446 = vadd.s32 %v432, %v429
      %v447 = vadd.s32 %v432, %v430
      %v448 = vadd.s32 %v432, %v431
      %vm449 = vcmp.ne.s32.totalorder %v433, %v317
      %vm450 = vcmp.ne.s32.totalorder %v434, %v317
      %vm451 = vcmp.ne.s32.totalorder %v435, %v317
      %vm452 = vcmp.ne.s32.totalorder %v436, %v317
      %vm453 = vcmp.ne.s32.totalorder %v437, %v317
      %vm454 = vcmp.ne.s32.totalorder %v438, %v317
      %vm455 = vcmp.ne.s32.totalorder %v439, %v317
      %vm456 = vcmp.ne.s32.totalorder %v440, %v317
      %vm457 = vcmp.ne.s32.totalorder %v441, %v317
      %vm458 = vcmp.ne.s32.totalorder %v442, %v317
      %vm459 = vcmp.ne.s32.totalorder %v443, %v317
      %vm460 = vcmp.ne.s32.totalorder %v444, %v317
      %vm461 = vcmp.ne.s32.totalorder %v445, %v317
      %vm462 = vcmp.ne.s32.totalorder %v446, %v317
      %vm463 = vcmp.ne.s32.totalorder %v447, %v317
      %vm464 = vcmp.ne.s32.totalorder %v448, %v317
      %v465 = vsel %vm318, 1, 0
      %vm466 = vcmp.eq.s32.totalorder %v465, 1
      %vm467 = vmand %vm449, %vm466
      %vm468 = vmand %vm450, %vm466
      %vm469 = vmand %vm451, %vm466
      %vm470 = vmand %vm452, %vm466
      %vm471 = vmand %vm453, %vm466
      %vm472 = vmand %vm454, %vm466
      %vm473 = vmand %vm455, %vm466
      %vm474 = vmand %vm456, %vm466
      %vm475 = vmand %vm457, %vm466
      %vm476 = vmand %vm458, %vm466
      %vm477 = vmand %vm459, %vm466
      %vm478 = vmand %vm460, %vm466
      %vm479 = vmand %vm461, %vm466
      %vm480 = vmand %vm462, %vm466
      %vm481 = vmand %vm463, %vm466
      %vm482 = vmand %vm464, %vm466
      %v483 = vsel %vm467, %v251, -1e+30
      %v484 = vsel %vm468, %v254, -1e+30
      %v485 = vsel %vm469, %v259, -1e+30
      %v486 = vsel %vm470, %v262, -1e+30
      %v487 = vsel %vm471, %v267, -1e+30
      %v488 = vsel %vm472, %v270, -1e+30
      %v489 = vsel %vm473, %v275, -1e+30
      %v490 = vsel %vm474, %v278, -1e+30
      %v491 = vsel %vm475, %v283, -1e+30
      %v492 = vsel %vm476, %v286, -1e+30
      %v493 = vsel %vm477, %v291, -1e+30
      %v494 = vsel %vm478, %v294, -1e+30
      %v495 = vsel %vm479, %v299, -1e+30
      %v496 = vsel %vm480, %v302, -1e+30
      %v497 = vsel %vm481, %v307, -1e+30
      %v498 = vsel %vm482, %v310, -1e+30
      %vm499 = vmand %vm388, %vm467
      %vm500 = vmand %vm389, %vm468
      %vm501 = vmand %vm390, %vm469
      %vm502 = vmand %vm391, %vm470
      %vm503 = vmand %vm392, %vm471
      %vm504 = vmand %vm393, %vm472
      %vm505 = vmand %vm394, %vm473
      %vm506 = vmand %vm395, %vm474
      %vm507 = vmand %vm396, %vm475
      %vm508 = vmand %vm397, %vm476
      %vm509 = vmand %vm398, %vm477
      %vm510 = vmand %vm399, %vm478
      %vm511 = vmand %vm400, %vm479
      %vm512 = vmand %vm401, %vm480
      %vm513 = vmand %vm402, %vm481
      %vm514 = vmand %vm403, %vm482
      %v515 = vsel %vm499, 1.0, 0.0
      %v516 = vsel %vm500, 1.0, 0.0
      %v517 = vsel %vm501, 1.0, 0.0
      %v518 = vsel %vm502, 1.0, 0.0
      %v519 = vsel %vm503, 1.0, 0.0
      %v520 = vsel %vm504, 1.0, 0.0
      %v521 = vsel %vm505, 1.0, 0.0
      %v522 = vsel %vm506, 1.0, 0.0
      %v523 = vsel %vm507, 1.0, 0.0
      %v524 = vsel %vm508, 1.0, 0.0
      %v525 = vsel %vm509, 1.0, 0.0
      %v526 = vsel %vm510, 1.0, 0.0
      %v527 = vsel %vm511, 1.0, 0.0
      %v528 = vsel %vm512, 1.0, 0.0
      %v529 = vsel %vm513, 1.0, 0.0
      %v530 = vsel %vm514, 1.0, 0.0
    $region25: #{tpu_custom_call.1} parent=1 // pred_fallthru
      %v531 = vphi 0, %v483
      %v532 = vphi 0, %v484
      %v533 = vphi 0, %v485
      %v534 = vphi 0, %v486
      %v535 = vphi 0, %v487
      %v536 = vphi 0, %v488
      %v537 = vphi 0, %v489
      %v538 = vphi 0, %v490
      %v539 = vphi 0, %v491
      %v540 = vphi 0, %v492
      %v541 = vphi 0, %v493
      %v542 = vphi 0, %v494
      %v543 = vphi 0, %v495
      %v544 = vphi 0, %v496
      %v545 = vphi 0, %v497
      %v546 = vphi 0, %v498
      %v547 = vphi 0, %v515
      %v548 = vphi 0, %v516
      %v549 = vphi 0, %v517
      %v550 = vphi 0, %v518
      %v551 = vphi 0, %v519
      %v552 = vphi 0, %v520
      %v553 = vphi 0, %v521
      %v554 = vphi 0, %v522
      %v555 = vphi 0, %v523
      %v556 = vphi 0, %v524
      %v557 = vphi 0, %v525
      %v558 = vphi 0, %v526
      %v559 = vphi 0, %v527
      %v560 = vphi 0, %v528
      %v561 = vphi 0, %v529
      %v562 = vphi 0, %v530
    // Predicated region
    $region26: #{tpu_custom_call.1} parent=1 // pred_check
      %p563 = pneg %p411
    $region27: #{tpu_custom_call.1} parent=1 // pred_check_branch
      %565 = sbr.rel (%p563) target = $region29
    $region28: #{tpu_custom_call.1} parent=1 // pred_region
      %v566 = vsel %vm318, 1, 0
      %vm567 = vcmp.eq.s32.totalorder %v566, 1
      %v568 = vsel %vm567, %v251, -1e+30
      %v569 = vsel %vm567, %v254, -1e+30
      %v570 = vsel %vm567, %v259, -1e+30
      %v571 = vsel %vm567, %v262, -1e+30
      %v572 = vsel %vm567, %v267, -1e+30
      %v573 = vsel %vm567, %v270, -1e+30
      %v574 = vsel %vm567, %v275, -1e+30
      %v575 = vsel %vm567, %v278, -1e+30
      %v576 = vsel %vm567, %v283, -1e+30
      %v577 = vsel %vm567, %v286, -1e+30
      %v578 = vsel %vm567, %v291, -1e+30
      %v579 = vsel %vm567, %v294, -1e+30
      %v580 = vsel %vm567, %v299, -1e+30
      %v581 = vsel %vm567, %v302, -1e+30
      %v582 = vsel %vm567, %v307, -1e+30
      %v583 = vsel %vm567, %v310, -1e+30
      %vm584 = vmand %vm388, %vm567
      %vm585 = vmand %vm389, %vm567
      %vm586 = vmand %vm390, %vm567
      %vm587 = vmand %vm391, %vm567
      %vm588 = vmand %vm392, %vm567
      %vm589 = vmand %vm393, %vm567
      %vm590 = vmand %vm394, %vm567
      %vm591 = vmand %vm395, %vm567
      %vm592 = vmand %vm396, %vm567
      %vm593 = vmand %vm397, %vm567
      %vm594 = vmand %vm398, %vm567
      %vm595 = vmand %vm399, %vm567
      %vm596 = vmand %vm400, %vm567
      %vm597 = vmand %vm401, %vm567
      %vm598 = vmand %vm402, %vm567
      %vm599 = vmand %vm403, %vm567
      %v600 = vsel %vm584, 1.0, 0.0
      %v601 = vsel %vm585, 1.0, 0.0
      %v602 = vsel %vm586, 1.0, 0.0
      %v603 = vsel %vm587, 1.0, 0.0
      %v604 = vsel %vm588, 1.0, 0.0
      %v605 = vsel %vm589, 1.0, 0.0
      %v606 = vsel %vm590, 1.0, 0.0
      %v607 = vsel %vm591, 1.0, 0.0
      %v608 = vsel %vm592, 1.0, 0.0
      %v609 = vsel %vm593, 1.0, 0.0
      %v610 = vsel %vm594, 1.0, 0.0
      %v611 = vsel %vm595, 1.0, 0.0
      %v612 = vsel %vm596, 1.0, 0.0
      %v613 = vsel %vm597, 1.0, 0.0
      %v614 = vsel %vm598, 1.0, 0.0
      %v615 = vsel %vm599, 1.0, 0.0
    $region29: #{tpu_custom_call.1} parent=1 // pred_fallthru
      %v616 = vphi %v531, %v568
      %v617 = vphi %v532, %v569
      %v618 = vphi %v533, %v570
      %v619 = vphi %v534, %v571
      %v620 = vphi %v535, %v572
      %v621 = vphi %v536, %v573
      %v622 = vphi %v537, %v574
      %v623 = vphi %v538, %v575
      %v624 = vphi %v539, %v576
      %v625 = vphi %v540, %v577
      %v626 = vphi %v541, %v578
      %v627 = vphi %v542, %v579
      %v628 = vphi %v543, %v580
      %v629 = vphi %v544, %v581
      %v630 = vphi %v545, %v582
      %v631 = vphi %v546, %v583
      %v632 = vphi %v547, %v600
      %v633 = vphi %v548, %v601
      %v634 = vphi %v549, %v602
      %v635 = vphi %v550, %v603
      %v636 = vphi %v551, %v604
      %v637 = vphi %v552, %v605
      %v638 = vphi %v553, %v606
      %v639 = vphi %v554, %v607
      %v640 = vphi %v555, %v608
      %v641 = vphi %v556, %v609
      %v642 = vphi %v557, %v610
      %v643 = vphi %v558, %v611
      %v644 = vphi %v559, %v612
      %v645 = vphi %v560, %v613
      %v646 = vphi %v561, %v614
      %v647 = vphi %v562, %v615
    %v648 = vld [vmem:[#allocation2] sm:$0xff]
    %v649 = vld [vmem:[#allocation2 + $0x8] sm:$0xff]
    %v650 = vld [vmem:[#allocation2 + $0x10] sm:$0xff]
    %v651 = vld [vmem:[#allocation2 + $0x18] sm:$0xff]
    %v652 = vld [vmem:[#allocation2 + $0x20] sm:$0xff]
    %v653 = vld [vmem:[#allocation2 + $0x28] sm:$0xff]
    %v654 = vld [vmem:[#allocation2 + $0x30] sm:$0xff]
    %v655 = vld [vmem:[#allocation2 + $0x38] sm:$0xff]
    %v656 = vld [vmem:[#allocation2 + $0x40] sm:$0xff]
    %v657 = vld [vmem:[#allocation2 + $0x48] sm:$0xff]
    %v658 = vld [vmem:[#allocation2 + $0x50] sm:$0xff]
    %v659 = vld [vmem:[#allocation2 + $0x58] sm:$0xff]
    %v660 = vld [vmem:[#allocation2 + $0x60] sm:$0xff]
    %v661 = vld [vmem:[#allocation2 + $0x68] sm:$0xff]
    %v662 = vld [vmem:[#allocation2 + $0x70] sm:$0xff]
    %v663 = vld [vmem:[#allocation2 + $0x78] sm:$0xff]
    %664 = vmax.xlane.f32.xlu0 %v616
    %v665 = vpop.xlane.xlu0 %664
    %666 = vmax.xlane.f32.xlu0 %v617
    %v667 = vpop.xlane.xlu0 %666
    %668 = vmax.xlane.f32.xlu0 %v618
    %v669 = vpop.xlane.xlu0 %668
    %670 = vmax.xlane.f32.xlu0 %v619
    %v671 = vpop.xlane.xlu0 %670
    %672 = vmax.xlane.f32.xlu0 %v620
    %v673 = vpop.xlane.xlu0 %672
    %674 = vmax.xlane.f32.xlu0 %v621
    %v675 = vpop.xlane.xlu0 %674
    %676 = vmax.xlane.f32.xlu0 %v622
    %v677 = vpop.xlane.xlu0 %676
    %678 = vmax.xlane.f32.xlu0 %v623
    %v679 = vpop.xlane.xlu0 %678
    %680 = vmax.xlane.f32.xlu0 %v624
    %v681 = vpop.xlane.xlu0 %680
    %682 = vmax.xlane.f32.xlu0 %v625
    %v683 = vpop.xlane.xlu0 %682
    %684 = vmax.xlane.f32.xlu0 %v626
    %v685 = vpop.xlane.xlu0 %684
    %686 = vmax.xlane.f32.xlu0 %v627
    %v687 = vpop.xlane.xlu0 %686
    %688 = vmax.xlane.f32.xlu0 %v628
    %v689 = vpop.xlane.xlu0 %688
    %690 = vmax.xlane.f32.xlu0 %v629
    %v691 = vpop.xlane.xlu0 %690
    %692 = vmax.xlane.f32.xlu0 %v630
    %v693 = vpop.xlane.xlu0 %692
    %694 = vmax.xlane.f32.xlu0 %v631
    %v695 = vpop.xlane.xlu0 %694
    %v696 = vmax.f32 %v648, %v665
    %v697 = vmax.f32 %v649, %v667
    %v698 = vmax.f32 %v650, %v669
    %v699 = vmax.f32 %v651, %v671
    %v700 = vmax.f32 %v652, %v673
    %v701 = vmax.f32 %v653, %v675
    %v702 = vmax.f32 %v654, %v677
    %v703 = vmax.f32 %v655, %v679
    %v704 = vmax.f32 %v656, %v681
    %v705 = vmax.f32 %v657, %v683
    %v706 = vmax.f32 %v658, %v685
    %v707 = vmax.f32 %v659, %v687
    %v708 = vmax.f32 %v660, %v689
    %v709 = vmax.f32 %v661, %v691
    %v710 = vmax.f32 %v662, %v693
    %v711 = vmax.f32 %v663, %v695
    %v712 = vsub.f32 %v648, %v696
    %v713 = vsub.f32 %v649, %v697
    %v714 = vsub.f32 %v650, %v698
    %v715 = vsub.f32 %v651, %v699
    %v716 = vsub.f32 %v652, %v700
    %v717 = vsub.f32 %v653, %v701
    %v718 = vsub.f32 %v654, %v702
    %v719 = vsub.f32 %v655, %v703
    %v720 = vsub.f32 %v656, %v704
    %v721 = vsub.f32 %v657, %v705
    %v722 = vsub.f32 %v658, %v706
    %v723 = vsub.f32 %v659, %v707
    %v724 = vsub.f32 %v660, %v708
    %v725 = vsub.f32 %v661, %v709
    %v726 = vsub.f32 %v662, %v710
    %v727 = vsub.f32 %v663, %v711
    %v728 = vmul.f32 %v712, 1.442695
    %v729 = vpow.pop %v728
    %v730 = vmul.f32 %v713, 1.442695
    %v731 = vpow.pop %v730
    %v732 = vmul.f32 %v714, 1.442695
    %v733 = vpow.pop %v732
    %v734 = vmul.f32 %v715, 1.442695
    %v735 = vpow.pop %v734
    %v736 = vmul.f32 %v716, 1.442695
    %v737 = vpow.pop %v736
    %v738 = vmul.f32 %v717, 1.442695
    %v739 = vpow.pop %v738
    %v740 = vmul.f32 %v718, 1.442695
    %v741 = vpow.pop %v740
    %v742 = vmul.f32 %v719, 1.442695
    %v743 = vpow.pop %v742
    %v744 = vmul.f32 %v720, 1.442695
    %v745 = vpow.pop %v744
    %v746 = vmul.f32 %v721, 1.442695
    %v747 = vpow.pop %v746
    %v748 = vmul.f32 %v722, 1.442695
    %v749 = vpow.pop %v748
    %v750 = vmul.f32 %v723, 1.442695
    %v751 = vpow.pop %v750
    %v752 = vmul.f32 %v724, 1.442695
    %v753 = vpow.pop %v752
    %v754 = vmul.f32 %v725, 1.442695
    %v755 = vpow.pop %v754
    %v756 = vmul.f32 %v726, 1.442695
    %v757 = vpow.pop %v756
    %v758 = vmul.f32 %v727, 1.442695
    %v759 = vpow.pop %v758
    %761 = vset.pattern.permute.xlu0 0
    %762 = vperm.xlu0 %761, %v696
    %v763 = vpop.permute.xlu0 %762
    %766 = vset.pattern.permute.xlu0 0
    %767 = vperm.xlu0 %766, %v697
    %v768 = vpop.permute.xlu0 %767
    %771 = vset.pattern.permute.xlu0 0
    %772 = vperm.xlu0 %771, %v698
    %v773 = vpop.permute.xlu0 %772
    %776 = vset.pattern.permute.xlu0 0
    %777 = vperm.xlu0 %776, %v699
    %v778 = vpop.permute.xlu0 %777
    %781 = vset.pattern.permute.xlu0 0
    %782 = vperm.xlu0 %781, %v700
    %v783 = vpop.permute.xlu0 %782
    %786 = vset.pattern.permute.xlu0 0
    %787 = vperm.xlu0 %786, %v701
    %v788 = vpop.permute.xlu0 %787
    %791 = vset.pattern.permute.xlu0 0
    %792 = vperm.xlu0 %791, %v702
    %v793 = vpop.permute.xlu0 %792
    %796 = vset.pattern.permute.xlu0 0
    %797 = vperm.xlu0 %796, %v703
    %v798 = vpop.permute.xlu0 %797
    %801 = vset.pattern.permute.xlu0 0
    %802 = vperm.xlu0 %801, %v704
    %v803 = vpop.permute.xlu0 %802
    %806 = vset.pattern.permute.xlu0 0
    %807 = vperm.xlu0 %806, %v705
    %v808 = vpop.permute.xlu0 %807
    %811 = vset.pattern.permute.xlu0 0
    %812 = vperm.xlu0 %811, %v706
    %v813 = vpop.permute.xlu0 %812
    %816 = vset.pattern.permute.xlu0 0
    %817 = vperm.xlu0 %816, %v707
    %v818 = vpop.permute.xlu0 %817
    %821 = vset.pattern.permute.xlu0 0
    %822 = vperm.xlu0 %821, %v708
    %v823 = vpop.permute.xlu0 %822
    %826 = vset.pattern.permute.xlu0 0
    %827 = vperm.xlu0 %826, %v709
    %v828 = vpop.permute.xlu0 %827
    %831 = vset.pattern.permute.xlu0 0
    %832 = vperm.xlu0 %831, %v710
    %v833 = vpop.permute.xlu0 %832
    %836 = vset.pattern.permute.xlu0 0
    %837 = vperm.xlu0 %836, %v711
    %v838 = vpop.permute.xlu0 %837
    %v840 = vsub.f32 %v616, %v763
    %v841 = vsub.f32 %v617, %v768
    %v842 = vsub.f32 %v618, %v773
    %v843 = vsub.f32 %v619, %v778
    %v844 = vsub.f32 %v620, %v783
    %v845 = vsub.f32 %v621, %v788
    %v846 = vsub.f32 %v622, %v793
    %v847 = vsub.f32 %v623, %v798
    %v848 = vsub.f32 %v624, %v803
    %v849 = vsub.f32 %v625, %v808
    %v850 = vsub.f32 %v626, %v813
    %v851 = vsub.f32 %v627, %v818
    %v852 = vsub.f32 %v628, %v823
    %v853 = vsub.f32 %v629, %v828
    %v854 = vsub.f32 %v630, %v833
    %v855 = vsub.f32 %v631, %v838
    %v856 = vmul.f32 %v840, 1.442695
    %v857 = vpow.pop %v856
    %v858 = vmul.f32 %v841, 1.442695
    %v859 = vpow.pop %v858
    %v860 = vmul.f32 %v842, 1.442695
    %v861 = vpow.pop %v860
    %v862 = vmul.f32 %v843, 1.442695
    %v863 = vpow.pop %v862
    %v864 = vmul.f32 %v844, 1.442695
    %v865 = vpow.pop %v864
    %v866 = vmul.f32 %v845, 1.442695
    %v867 = vpow.pop %v866
    %v868 = vmul.f32 %v846, 1.442695
    %v869 = vpow.pop %v868
    %v870 = vmul.f32 %v847, 1.442695
    %v871 = vpow.pop %v870
    %v872 = vmul.f32 %v848, 1.442695
    %v873 = vpow.pop %v872
    %v874 = vmul.f32 %v849, 1.442695
    %v875 = vpow.pop %v874
    %v876 = vmul.f32 %v850, 1.442695
    %v877 = vpow.pop %v876
    %v878 = vmul.f32 %v851, 1.442695
    %v879 = vpow.pop %v878
    %v880 = vmul.f32 %v852, 1.442695
    %v881 = vpow.pop %v880
    %v882 = vmul.f32 %v853, 1.442695
    %v883 = vpow.pop %v882
    %v884 = vmul.f32 %v854, 1.442695
    %v885 = vpow.pop %v884
    %v886 = vmul.f32 %v855, 1.442695
    %v887 = vpow.pop %v886
    %v888 = vld [vmem:[#allocation3] sm:$0xff]
    %v889 = vld [vmem:[#allocation3 + $0x8] sm:$0xff]
    %v890 = vld [vmem:[#allocation3 + $0x10] sm:$0xff]
    %v891 = vld [vmem:[#allocation3 + $0x18] sm:$0xff]
    %v892 = vld [vmem:[#allocation3 + $0x20] sm:$0xff]
    %v893 = vld [vmem:[#allocation3 + $0x28] sm:$0xff]
    %v894 = vld [vmem:[#allocation3 + $0x30] sm:$0xff]
    %v895 = vld [vmem:[#allocation3 + $0x38] sm:$0xff]
    %v896 = vld [vmem:[#allocation3 + $0x40] sm:$0xff]
    %v897 = vld [vmem:[#allocation3 + $0x48] sm:$0xff]
    %v898 = vld [vmem:[#allocation3 + $0x50] sm:$0xff]
    %v899 = vld [vmem:[#allocation3 + $0x58] sm:$0xff]
    %v900 = vld [vmem:[#allocation3 + $0x60] sm:$0xff]
    %v901 = vld [vmem:[#allocation3 + $0x68] sm:$0xff]
    %v902 = vld [vmem:[#allocation3 + $0x70] sm:$0xff]
    %v903 = vld [vmem:[#allocation3 + $0x78] sm:$0xff]
    %v904 = vmul.f32 %v729, %v888
    %v905 = vmul.f32 %v731, %v889
    %v906 = vmul.f32 %v733, %v890
    %v907 = vmul.f32 %v735, %v891
    %v908 = vmul.f32 %v737, %v892
    %v909 = vmul.f32 %v739, %v893
    %v910 = vmul.f32 %v741, %v894
    %v911 = vmul.f32 %v743, %v895
    %v912 = vmul.f32 %v745, %v896
    %v913 = vmul.f32 %v747, %v897
    %v914 = vmul.f32 %v749, %v898
    %v915 = vmul.f32 %v751, %v899
    %v916 = vmul.f32 %v753, %v900
    %v917 = vmul.f32 %v755, %v901
    %v918 = vmul.f32 %v757, %v902
    %v919 = vmul.f32 %v759, %v903
    %920 = vadd.xlane.f32.xlu0 %v857
    %v921 = vpop.xlane.xlu0 %920
    %922 = vadd.xlane.f32.xlu0 %v859
    %v923 = vpop.xlane.xlu0 %922
    %924 = vadd.xlane.f32.xlu0 %v861
    %v925 = vpop.xlane.xlu0 %924
    %926 = vadd.xlane.f32.xlu0 %v863
    %v927 = vpop.xlane.xlu0 %926
    %928 = vadd.xlane.f32.xlu0 %v865
    %v929 = vpop.xlane.xlu0 %928
    %930 = vadd.xlane.f32.xlu0 %v867
    %v931 = vpop.xlane.xlu0 %930
    %932 = vadd.xlane.f32.xlu0 %v869
    %v933 = vpop.xlane.xlu0 %932
    %934 = vadd.xlane.f32.xlu0 %v871
    %v935 = vpop.xlane.xlu0 %934
    %936 = vadd.xlane.f32.xlu0 %v873
    %v937 = vpop.xlane.xlu0 %936
    %938 = vadd.xlane.f32.xlu0 %v875
    %v939 = vpop.xlane.xlu0 %938
    %940 = vadd.xlane.f32.xlu0 %v877
    %v941 = vpop.xlane.xlu0 %940
    %942 = vadd.xlane.f32.xlu0 %v879
    %v943 = vpop.xlane.xlu0 %942
    %944 = vadd.xlane.f32.xlu0 %v881
    %v945 = vpop.xlane.xlu0 %944
    %946 = vadd.xlane.f32.xlu0 %v883
    %v947 = vpop.xlane.xlu0 %946
    %948 = vadd.xlane.f32.xlu0 %v885
    %v949 = vpop.xlane.xlu0 %948
    %950 = vadd.xlane.f32.xlu0 %v887
    %v951 = vpop.xlane.xlu0 %950
    %v952 = vadd.f32 %v904, %v921
    %v953 = vadd.f32 %v905, %v923
    %v954 = vadd.f32 %v906, %v925
    %v955 = vadd.f32 %v907, %v927
    %v956 = vadd.f32 %v908, %v929
    %v957 = vadd.f32 %v909, %v931
    %v958 = vadd.f32 %v910, %v933
    %v959 = vadd.f32 %v911, %v935
    %v960 = vadd.f32 %v912, %v937
    %v961 = vadd.f32 %v913, %v939
    %v962 = vadd.f32 %v914, %v941
    %v963 = vadd.f32 %v915, %v943
    %v964 = vadd.f32 %v916, %v945
    %v965 = vadd.f32 %v917, %v947
    %v966 = vadd.f32 %v918, %v949
    %v967 = vadd.f32 %v919, %v951
    %vm968 = vcmask 7168
    %969 = vst.msk [vmem:[#allocation3] sm:$0xff] %vm968, %v952
    %970 = vst.msk [vmem:[#allocation3 + $0x8] sm:$0xff] %vm968, %v953
    %971 = vst.msk [vmem:[#allocation3 + $0x10] sm:$0xff] %vm968, %v954
    %972 = vst.msk [vmem:[#allocation3 + $0x18] sm:$0xff] %vm968, %v955
    %973 = vst.msk [vmem:[#allocation3 + $0x20] sm:$0xff] %vm968, %v956
    %974 = vst.msk [vmem:[#allocation3 + $0x28] sm:$0xff] %vm968, %v957
    %975 = vst.msk [vmem:[#allocation3 + $0x30] sm:$0xff] %vm968, %v958
    %976 = vst.msk [vmem:[#allocation3 + $0x38] sm:$0xff] %vm968, %v959
    %977 = vst.msk [vmem:[#allocation3 + $0x40] sm:$0xff] %vm968, %v960
    %978 = vst.msk [vmem:[#allocation3 + $0x48] sm:$0xff] %vm968, %v961
    %979 = vst.msk [vmem:[#allocation3 + $0x50] sm:$0xff] %vm968, %v962
    %980 = vst.msk [vmem:[#allocation3 + $0x58] sm:$0xff] %vm968, %v963
    %981 = vst.msk [vmem:[#allocation3 + $0x60] sm:$0xff] %vm968, %v964
    %982 = vst.msk [vmem:[#allocation3 + $0x68] sm:$0xff] %vm968, %v965
    %983 = vst.msk [vmem:[#allocation3 + $0x70] sm:$0xff] %vm968, %v966
    %984 = vst.msk [vmem:[#allocation3 + $0x78] sm:$0xff] %vm968, %v967
    %v985 = vld [vmem:[#allocation4] sm:$0xff]
    %v986 = vld [vmem:[#allocation4 + $0x8] sm:$0xff]
    %v987 = vld [vmem:[#allocation4 + $0x10] sm:$0xff]
    %v988 = vld [vmem:[#allocation4 + $0x18] sm:$0xff]
    %v989 = vld [vmem:[#allocation4 + $0x20] sm:$0xff]
    %v990 = vld [vmem:[#allocation4 + $0x28] sm:$0xff]
    %v991 = vld [vmem:[#allocation4 + $0x30] sm:$0xff]
    %v992 = vld [vmem:[#allocation4 + $0x38] sm:$0xff]
    %v993 = vld [vmem:[#allocation4 + $0x40] sm:$0xff]
    %v994 = vld [vmem:[#allocation4 + $0x48] sm:$0xff]
    %v995 = vld [vmem:[#allocation4 + $0x50] sm:$0xff]
    %v996 = vld [vmem:[#allocation4 + $0x58] sm:$0xff]
    %v997 = vld [vmem:[#allocation4 + $0x60] sm:$0xff]
    %v998 = vld [vmem:[#allocation4 + $0x68] sm:$0xff]
    %v999 = vld [vmem:[#allocation4 + $0x70] sm:$0xff]
    %v1000 = vld [vmem:[#allocation4 + $0x78] sm:$0xff]
    %v1001 = vmul.f32 %v632, %v251
    %v1002 = vmul.f32 %v633, %v254
    %v1003 = vmul.f32 %v634, %v259
    %v1004 = vmul.f32 %v635, %v262
    %v1005 = vmul.f32 %v636, %v267
    %v1006 = vmul.f32 %v637, %v270
    %v1007 = vmul.f32 %v638, %v275
    %v1008 = vmul.f32 %v639, %v278
    %v1009 = vmul.f32 %v640, %v283
    %v1010 = vmul.f32 %v641, %v286
    %v1011 = vmul.f32 %v642, %v291
    %v1012 = vmul.f32 %v643, %v294
    %v1013 = vmul.f32 %v644, %v299
    %v1014 = vmul.f32 %v645, %v302
    %v1015 = vmul.f32 %v646, %v307
    %v1016 = vmul.f32 %v647, %v310
    %1017 = vadd.xlane.f32.xlu0 %v1001
    %v1018 = vpop.xlane.xlu0 %1017
    %1019 = vadd.xlane.f32.xlu0 %v1002
    %v1020 = vpop.xlane.xlu0 %1019
    %1021 = vadd.xlane.f32.xlu0 %v1003
    %v1022 = vpop.xlane.xlu0 %1021
    %1023 = vadd.xlane.f32.xlu0 %v1004
    %v1024 = vpop.xlane.xlu0 %1023
    %1025 = vadd.xlane.f32.xlu0 %v1005
    %v1026 = vpop.xlane.xlu0 %1025
    %1027 = vadd.xlane.f32.xlu0 %v1006
    %v1028 = vpop.xlane.xlu0 %1027
    %1029 = vadd.xlane.f32.xlu0 %v1007
    %v1030 = vpop.xlane.xlu0 %1029
    %1031 = vadd.xlane.f32.xlu0 %v1008
    %v1032 = vpop.xlane.xlu0 %1031
    %1033 = vadd.xlane.f32.xlu0 %v1009
    %v1034 = vpop.xlane.xlu0 %1033
    %1035 = vadd.xlane.f32.xlu0 %v1010
    %v1036 = vpop.xlane.xlu0 %1035
    %1037 = vadd.xlane.f32.xlu0 %v1011
    %v1038 = vpop.xlane.xlu0 %1037
    %1039 = vadd.xlane.f32.xlu0 %v1012
    %v1040 = vpop.xlane.xlu0 %1039
    %1041 = vadd.xlane.f32.xlu0 %v1013
    %v1042 = vpop.xlane.xlu0 %1041
    %1043 = vadd.xlane.f32.xlu0 %v1014
    %v1044 = vpop.xlane.xlu0 %1043
    %1045 = vadd.xlane.f32.xlu0 %v1015
    %v1046 = vpop.xlane.xlu0 %1045
    %1047 = vadd.xlane.f32.xlu0 %v1016
    %v1048 = vpop.xlane.xlu0 %1047
    %v1049 = vadd.f32 %v985, %v1018
    %v1050 = vadd.f32 %v986, %v1020
    %v1051 = vadd.f32 %v987, %v1022
    %v1052 = vadd.f32 %v988, %v1024
    %v1053 = vadd.f32 %v989, %v1026
    %v1054 = vadd.f32 %v990, %v1028
    %v1055 = vadd.f32 %v991, %v1030
    %v1056 = vadd.f32 %v992, %v1032
    %v1057 = vadd.f32 %v993, %v1034
    %v1058 = vadd.f32 %v994, %v1036
    %v1059 = vadd.f32 %v995, %v1038
    %v1060 = vadd.f32 %v996, %v1040
    %v1061 = vadd.f32 %v997, %v1042
    %v1062 = vadd.f32 %v998, %v1044
    %v1063 = vadd.f32 %v999, %v1046
    %v1064 = vadd.f32 %v1000, %v1048
    %1065 = vst.msk [vmem:[#allocation4] sm:$0xff] %vm968, %v1049
    %1066 = vst.msk [vmem:[#allocation4 + $0x8] sm:$0xff] %vm968, %v1050
    %1067 = vst.msk [vmem:[#allocation4 + $0x10] sm:$0xff] %vm968, %v1051
    %1068 = vst.msk [vmem:[#allocation4 + $0x18] sm:$0xff] %vm968, %v1052
    %1069 = vst.msk [vmem:[#allocation4 + $0x20] sm:$0xff] %vm968, %v1053
    %1070 = vst.msk [vmem:[#allocation4 + $0x28] sm:$0xff] %vm968, %v1054
    %1071 = vst.msk [vmem:[#allocation4 + $0x30] sm:$0xff] %vm968, %v1055
    %1072 = vst.msk [vmem:[#allocation4 + $0x38] sm:$0xff] %vm968, %v1056
    %1073 = vst.msk [vmem:[#allocation4 + $0x40] sm:$0xff] %vm968, %v1057
    %1074 = vst.msk [vmem:[#allocation4 + $0x48] sm:$0xff] %vm968, %v1058
    %1075 = vst.msk [vmem:[#allocation4 + $0x50] sm:$0xff] %vm968, %v1059
    %1076 = vst.msk [vmem:[#allocation4 + $0x58] sm:$0xff] %vm968, %v1060
    %1077 = vst.msk [vmem:[#allocation4 + $0x60] sm:$0xff] %vm968, %v1061
    %1078 = vst.msk [vmem:[#allocation4 + $0x68] sm:$0xff] %vm968, %v1062
    %1079 = vst.msk [vmem:[#allocation4 + $0x70] sm:$0xff] %vm968, %v1063
    %1080 = vst.msk [vmem:[#allocation4 + $0x78] sm:$0xff] %vm968, %v1064
    %v1081 = vld [vmem:[#allocation5] sm:$0xff]
    %v1082 = vld [vmem:[#allocation5 + $0x8] sm:$0xff]
    %v1083 = vld [vmem:[#allocation5 + $0x10] sm:$0xff]
    %v1084 = vld [vmem:[#allocation5 + $0x18] sm:$0xff]
    %v1085 = vld [vmem:[#allocation5 + $0x20] sm:$0xff]
    %v1086 = vld [vmem:[#allocation5 + $0x28] sm:$0xff]
    %v1087 = vld [vmem:[#allocation5 + $0x30] sm:$0xff]
    %v1088 = vld [vmem:[#allocation5 + $0x38] sm:$0xff]
    %v1089 = vld [vmem:[#allocation5 + $0x40] sm:$0xff]
    %v1090 = vld [vmem:[#allocation5 + $0x48] sm:$0xff]
    %v1091 = vld [vmem:[#allocation5 + $0x50] sm:$0xff]
    %v1092 = vld [vmem:[#allocation5 + $0x58] sm:$0xff]
    %v1093 = vld [vmem:[#allocation5 + $0x60] sm:$0xff]
    %v1094 = vld [vmem:[#allocation5 + $0x68] sm:$0xff]
    %v1095 = vld [vmem:[#allocation5 + $0x70] sm:$0xff]
    %v1096 = vld [vmem:[#allocation5 + $0x78] sm:$0xff]
    %1097 = vadd.xlane.f32.xlu0 %v632
    %v1098 = vpop.xlane.xlu0 %1097
    %1099 = vadd.xlane.f32.xlu0 %v633
    %v1100 = vpop.xlane.xlu0 %1099
    %1101 = vadd.xlane.f32.xlu0 %v634
    %v1102 = vpop.xlane.xlu0 %1101
    %1103 = vadd.xlane.f32.xlu0 %v635
    %v1104 = vpop.xlane.xlu0 %1103
    %1105 = vadd.xlane.f32.xlu0 %v636
    %v1106 = vpop.xlane.xlu0 %1105
    %1107 = vadd.xlane.f32.xlu0 %v637
    %v1108 = vpop.xlane.xlu0 %1107
    %1109 = vadd.xlane.f32.xlu0 %v638
    %v1110 = vpop.xlane.xlu0 %1109
    %1111 = vadd.xlane.f32.xlu0 %v639
    %v1112 = vpop.xlane.xlu0 %1111
    %1113 = vadd.xlane.f32.xlu0 %v640
    %v1114 = vpop.xlane.xlu0 %1113
    %1115 = vadd.xlane.f32.xlu0 %v641
    %v1116 = vpop.xlane.xlu0 %1115
    %1117 = vadd.xlane.f32.xlu0 %v642
    %v1118 = vpop.xlane.xlu0 %1117
    %1119 = vadd.xlane.f32.xlu0 %v643
    %v1120 = vpop.xlane.xlu0 %1119
    %1121 = vadd.xlane.f32.xlu0 %v644
    %v1122 = vpop.xlane.xlu0 %1121
    %1123 = vadd.xlane.f32.xlu0 %v645
    %v1124 = vpop.xlane.xlu0 %1123
    %1125 = vadd.xlane.f32.xlu0 %v646
    %v1126 = vpop.xlane.xlu0 %1125
    %1127 = vadd.xlane.f32.xlu0 %v647
    %v1128 = vpop.xlane.xlu0 %1127
    %v1129 = vadd.f32 %v1081, %v1098
    %v1130 = vadd.f32 %v1082, %v1100
    %v1131 = vadd.f32 %v1083, %v1102
    %v1132 = vadd.f32 %v1084, %v1104
    %v1133 = vadd.f32 %v1085, %v1106
    %v1134 = vadd.f32 %v1086, %v1108
    %v1135 = vadd.f32 %v1087, %v1110
    %v1136 = vadd.f32 %v1088, %v1112
    %v1137 = vadd.f32 %v1089, %v1114
    %v1138 = vadd.f32 %v1090, %v1116
    %v1139 = vadd.f32 %v1091, %v1118
    %v1140 = vadd.f32 %v1092, %v1120
    %v1141 = vadd.f32 %v1093, %v1122
    %v1142 = vadd.f32 %v1094, %v1124
    %v1143 = vadd.f32 %v1095, %v1126
    %v1144 = vadd.f32 %v1096, %v1128
    %1145 = vst.msk [vmem:[#allocation5] sm:$0xff] %vm968, %v1129
    %1146 = vst.msk [vmem:[#allocation5 + $0x8] sm:$0xff] %vm968, %v1130
    %1147 = vst.msk [vmem:[#allocation5 + $0x10] sm:$0xff] %vm968, %v1131
    %1148 = vst.msk [vmem:[#allocation5 + $0x18] sm:$0xff] %vm968, %v1132
    %1149 = vst.msk [vmem:[#allocation5 + $0x20] sm:$0xff] %vm968, %v1133
    %1150 = vst.msk [vmem:[#allocation5 + $0x28] sm:$0xff] %vm968, %v1134
    %1151 = vst.msk [vmem:[#allocation5 + $0x30] sm:$0xff] %vm968, %v1135
    %1152 = vst.msk [vmem:[#allocation5 + $0x38] sm:$0xff] %vm968, %v1136
    %1153 = vst.msk [vmem:[#allocation5 + $0x40] sm:$0xff] %vm968, %v1137
    %1154 = vst.msk [vmem:[#allocation5 + $0x48] sm:$0xff] %vm968, %v1138
    %1155 = vst.msk [vmem:[#allocation5 + $0x50] sm:$0xff] %vm968, %v1139
    %1156 = vst.msk [vmem:[#allocation5 + $0x58] sm:$0xff] %vm968, %v1140
    %1157 = vst.msk [vmem:[#allocation5 + $0x60] sm:$0xff] %vm968, %v1141
    %1158 = vst.msk [vmem:[#allocation5 + $0x68] sm:$0xff] %vm968, %v1142
    %1159 = vst.msk [vmem:[#allocation5 + $0x70] sm:$0xff] %vm968, %v1143
    %1160 = vst.msk [vmem:[#allocation5 + $0x78] sm:$0xff] %vm968, %v1144
    %1161 = vst.msk [vmem:[#allocation2] sm:$0xff] %vm968, %v696
    %1162 = vst.msk [vmem:[#allocation2 + $0x8] sm:$0xff] %vm968, %v697
    %1163 = vst.msk [vmem:[#allocation2 + $0x10] sm:$0xff] %vm968, %v698
    %1164 = vst.msk [vmem:[#allocation2 + $0x18] sm:$0xff] %vm968, %v699
    %1165 = vst.msk [vmem:[#allocation2 + $0x20] sm:$0xff] %vm968, %v700
    %1166 = vst.msk [vmem:[#allocation2 + $0x28] sm:$0xff] %vm968, %v701
    %1167 = vst.msk [vmem:[#allocation2 + $0x30] sm:$0xff] %vm968, %v702
    %1168 = vst.msk [vmem:[#allocation2 + $0x38] sm:$0xff] %vm968, %v703
    %1169 = vst.msk [vmem:[#allocation2 + $0x40] sm:$0xff] %vm968, %v704
    %1170 = vst.msk [vmem:[#allocation2 + $0x48] sm:$0xff] %vm968, %v705
    %1171 = vst.msk [vmem:[#allocation2 + $0x50] sm:$0xff] %vm968, %v706
    %1172 = vst.msk [vmem:[#allocation2 + $0x58] sm:$0xff] %vm968, %v707
    %1173 = vst.msk [vmem:[#allocation2 + $0x60] sm:$0xff] %vm968, %v708
    %1174 = vst.msk [vmem:[#allocation2 + $0x68] sm:$0xff] %vm968, %v709
    %1175 = vst.msk [vmem:[#allocation2 + $0x70] sm:$0xff] %vm968, %v710
    %1176 = vst.msk [vmem:[#allocation2 + $0x78] sm:$0xff] %vm968, %v711
    // Predicated region
    $region30: #{tpu_custom_call.1} parent=1 // pred_check
      %p1177 = pneg %p19
    $region31: #{tpu_custom_call.1} parent=1 // pred_check_branch
      %1179 = sbr.rel (%p1177) target = $region33
    $region32: #{tpu_custom_call.1} parent=1 // pred_region
      %v1180 = vld [vmem:[#allocation2] sm:$0xff]
      %v1181 = vld [vmem:[#allocation2 + $0x8] sm:$0xff]
      %v1182 = vld [vmem:[#allocation2 + $0x10] sm:$0xff]
      %v1183 = vld [vmem:[#allocation2 + $0x18] sm:$0xff]
      %v1184 = vld [vmem:[#allocation2 + $0x20] sm:$0xff]
      %v1185 = vld [vmem:[#allocation2 + $0x28] sm:$0xff]
      %v1186 = vld [vmem:[#allocation2 + $0x30] sm:$0xff]
      %v1187 = vld [vmem:[#allocation2 + $0x38] sm:$0xff]
      %v1188 = vld [vmem:[#allocation2 + $0x40] sm:$0xff]
      %v1189 = vld [vmem:[#allocation2 + $0x48] sm:$0xff]
      %v1190 = vld [vmem:[#allocation2 + $0x50] sm:$0xff]
      %v1191 = vld [vmem:[#allocation2 + $0x58] sm:$0xff]
      %v1192 = vld [vmem:[#allocation2 + $0x60] sm:$0xff]
      %v1193 = vld [vmem:[#allocation2 + $0x68] sm:$0xff]
      %v1194 = vld [vmem:[#allocation2 + $0x70] sm:$0xff]
      %v1195 = vld [vmem:[#allocation2 + $0x78] sm:$0xff]
      %v1196 = vld [vmem:[#allocation3] sm:$0xff]
      %v1197 = vld [vmem:[#allocation3 + $0x8] sm:$0xff]
      %v1198 = vld [vmem:[#allocation3 + $0x10] sm:$0xff]
      %v1199 = vld [vmem:[#allocation3 + $0x18] sm:$0xff]
      %v1200 = vld [vmem:[#allocation3 + $0x20] sm:$0xff]
      %v1201 = vld [vmem:[#allocation3 + $0x28] sm:$0xff]
      %v1202 = vld [vmem:[#allocation3 + $0x30] sm:$0xff]
      %v1203 = vld [vmem:[#allocation3 + $0x38] sm:$0xff]
      %v1204 = vld [vmem:[#allocation3 + $0x40] sm:$0xff]
      %v1205 = vld [vmem:[#allocation3 + $0x48] sm:$0xff]
      %v1206 = vld [vmem:[#allocation3 + $0x50] sm:$0xff]
      %v1207 = vld [vmem:[#allocation3 + $0x58] sm:$0xff]
      %v1208 = vld [vmem:[#allocation3 + $0x60] sm:$0xff]
      %v1209 = vld [vmem:[#allocation3 + $0x68] sm:$0xff]
      %v1210 = vld [vmem:[#allocation3 + $0x70] sm:$0xff]
      %v1211 = vld [vmem:[#allocation3 + $0x78] sm:$0xff]
      %v1212 = vlog2.pop %v1196
      %v1213 = vmul.f32 %v1212, 0.6931472
      %v1214 = vlog2.pop %v1197
      %v1215 = vmul.f32 %v1214, 0.6931472
      %v1216 = vlog2.pop %v1198
      %v1217 = vmul.f32 %v1216, 0.6931472
      %v1218 = vlog2.pop %v1199
      %v1219 = vmul.f32 %v1218, 0.6931472
      %v1220 = vlog2.pop %v1200
      %v1221 = vmul.f32 %v1220, 0.6931472
      %v1222 = vlog2.pop %v1201
      %v1223 = vmul.f32 %v1222, 0.6931472
      %v1224 = vlog2.pop %v1202
      %v1225 = vmul.f32 %v1224, 0.6931472
      %v1226 = vlog2.pop %v1203
      %v1227 = vmul.f32 %v1226, 0.6931472
      %v1228 = vlog2.pop %v1204
      %v1229 = vmul.f32 %v1228, 0.6931472
      %v1230 = vlog2.pop %v1205
      %v1231 = vmul.f32 %v1230, 0.6931472
      %v1232 = vlog2.pop %v1206
      %v1233 = vmul.f32 %v1232, 0.6931472
      %v1234 = vlog2.pop %v1207
      %v1235 = vmul.f32 %v1234, 0.6931472
      %v1236 = vlog2.pop %v1208
      %v1237 = vmul.f32 %v1236, 0.6931472
      %v1238 = vlog2.pop %v1209
      %v1239 = vmul.f32 %v1238, 0.6931472
      %v1240 = vlog2.pop %v1210
      %v1241 = vmul.f32 %v1240, 0.6931472
      %v1242 = vlog2.pop %v1211
      %v1243 = vmul.f32 %v1242, 0.6931472
      %v1244 = vadd.f32 %v1180, %v1213
      %v1245 = vadd.f32 %v1181, %v1215
      %v1246 = vadd.f32 %v1182, %v1217
      %v1247 = vadd.f32 %v1183, %v1219
      %v1248 = vadd.f32 %v1184, %v1221
      %v1249 = vadd.f32 %v1185, %v1223
      %v1250 = vadd.f32 %v1186, %v1225
      %v1251 = vadd.f32 %v1187, %v1227
      %v1252 = vadd.f32 %v1188, %v1229
      %v1253 = vadd.f32 %v1189, %v1231
      %v1254 = vadd.f32 %v1190, %v1233
      %v1255 = vadd.f32 %v1191, %v1235
      %v1256 = vadd.f32 %v1192, %v1237
      %v1257 = vadd.f32 %v1193, %v1239
      %v1258 = vadd.f32 %v1194, %v1241
      %v1259 = vadd.f32 %v1195, %v1243
      %v1260 = vld [vmem:[#allocation5] sm:$0xff]
      %v1261 = vld [vmem:[#allocation5 + $0x8] sm:$0xff]
      %v1262 = vld [vmem:[#allocation5 + $0x10] sm:$0xff]
      %v1263 = vld [vmem:[#allocation5 + $0x18] sm:$0xff]
      %v1264 = vld [vmem:[#allocation5 + $0x20] sm:$0xff]
      %v1265 = vld [vmem:[#allocation5 + $0x28] sm:$0xff]
      %v1266 = vld [vmem:[#allocation5 + $0x30] sm:$0xff]
      %v1267 = vld [vmem:[#allocation5 + $0x38] sm:$0xff]
      %v1268 = vld [vmem:[#allocation5 + $0x40] sm:$0xff]
      %v1269 = vld [vmem:[#allocation5 + $0x48] sm:$0xff]
      %v1270 = vld [vmem:[#allocation5 + $0x50] sm:$0xff]
      %v1271 = vld [vmem:[#allocation5 + $0x58] sm:$0xff]
      %v1272 = vld [vmem:[#allocation5 + $0x60] sm:$0xff]
      %v1273 = vld [vmem:[#allocation5 + $0x68] sm:$0xff]
      %v1274 = vld [vmem:[#allocation5 + $0x70] sm:$0xff]
      %v1275 = vld [vmem:[#allocation5 + $0x78] sm:$0xff]
      %v1276 = vld [vmem:[#allocation4] sm:$0xff]
      %v1277 = vld [vmem:[#allocation4 + $0x8] sm:$0xff]
      %v1278 = vld [vmem:[#allocation4 + $0x10] sm:$0xff]
      %v1279 = vld [vmem:[#allocation4 + $0x18] sm:$0xff]
      %v1280 = vld [vmem:[#allocation4 + $0x20] sm:$0xff]
      %v1281 = vld [vmem:[#allocation4 + $0x28] sm:$0xff]
      %v1282 = vld [vmem:[#allocation4 + $0x30] sm:$0xff]
      %v1283 = vld [vmem:[#allocation4 + $0x38] sm:$0xff]
      %v1284 = vld [vmem:[#allocation4 + $0x40] sm:$0xff]
      %v1285 = vld [vmem:[#allocation4 + $0x48] sm:$0xff]
      %v1286 = vld [vmem:[#allocation4 + $0x50] sm:$0xff]
      %v1287 = vld [vmem:[#allocation4 + $0x58] sm:$0xff]
      %v1288 = vld [vmem:[#allocation4 + $0x60] sm:$0xff]
      %v1289 = vld [vmem:[#allocation4 + $0x68] sm:$0xff]
      %v1290 = vld [vmem:[#allocation4 + $0x70] sm:$0xff]
      %v1291 = vld [vmem:[#allocation4 + $0x78] sm:$0xff]
      %v1292 = vmul.f32 %v1260, %v1244
      %v1293 = vmul.f32 %v1261, %v1245
      %v1294 = vmul.f32 %v1262, %v1246
      %v1295 = vmul.f32 %v1263, %v1247
      %v1296 = vmul.f32 %v1264, %v1248
      %v1297 = vmul.f32 %v1265, %v1249
      %v1298 = vmul.f32 %v1266, %v1250
      %v1299 = vmul.f32 %v1267, %v1251
      %v1300 = vmul.f32 %v1268, %v1252
      %v1301 = vmul.f32 %v1269, %v1253
      %v1302 = vmul.f32 %v1270, %v1254
      %v1303 = vmul.f32 %v1271, %v1255
      %v1304 = vmul.f32 %v1272, %v1256
      %v1305 = vmul.f32 %v1273, %v1257
      %v1306 = vmul.f32 %v1274, %v1258
      %v1307 = vmul.f32 %v1275, %v1259
      %v1308 = vsub.f32 %v1276, %v1292
      %v1309 = vsub.f32 %v1277, %v1293
      %v1310 = vsub.f32 %v1278, %v1294
      %v1311 = vsub.f32 %v1279, %v1295
      %v1312 = vsub.f32 %v1280, %v1296
      %v1313 = vsub.f32 %v1281, %v1297
      %v1314 = vsub.f32 %v1282, %v1298
      %v1315 = vsub.f32 %v1283, %v1299
      %v1316 = vsub.f32 %v1284, %v1300
      %v1317 = vsub.f32 %v1285, %v1301
      %v1318 = vsub.f32 %v1286, %v1302
      %v1319 = vsub.f32 %v1287, %v1303
      %v1320 = vsub.f32 %v1288, %v1304
      %v1321 = vsub.f32 %v1289, %v1305
      %v1322 = vsub.f32 %v1290, %v1306
      %v1323 = vsub.f32 %v1291, %v1307
      %v1324 = vadd.f32 %v1260, 1e-06
      %v1325 = vadd.f32 %v1261, 1e-06
      %v1326 = vadd.f32 %v1262, 1e-06
      %v1327 = vadd.f32 %v1263, 1e-06
      %v1328 = vadd.f32 %v1264, 1e-06
      %v1329 = vadd.f32 %v1265, 1e-06
      %v1330 = vadd.f32 %v1266, 1e-06
      %v1331 = vadd.f32 %v1267, 1e-06
      %v1332 = vadd.f32 %v1268, 1e-06
      %v1333 = vadd.f32 %v1269, 1e-06
      %v1334 = vadd.f32 %v1270, 1e-06
      %v1335 = vadd.f32 %v1271, 1e-06
      %v1336 = vadd.f32 %v1272, 1e-06
      %v1337 = vadd.f32 %v1273, 1e-06
      %v1338 = vadd.f32 %v1274, 1e-06
      %v1339 = vadd.f32 %v1275, 1e-06
      %v1340 = vrcp.pop %v1324
      %v1341 = vmul.f32 %v1308, %v1340
      %v1342 = vrcp.pop %v1325
      %v1343 = vmul.f32 %v1309, %v1342
      %v1344 = vrcp.pop %v1326
      %v1345 = vmul.f32 %v1310, %v1344
      %v1346 = vrcp.pop %v1327
      %v1347 = vmul.f32 %v1311, %v1346
      %v1348 = vrcp.pop %v1328
      %v1349 = vmul.f32 %v1312, %v1348
      %v1350 = vrcp.pop %v1329
      %v1351 = vmul.f32 %v1313, %v1350
      %v1352 = vrcp.pop %v1330
      %v1353 = vmul.f32 %v1314, %v1352
      %v1354 = vrcp.pop %v1331
      %v1355 = vmul.f32 %v1315, %v1354
      %v1356 = vrcp.pop %v1332
      %v1357 = vmul.f32 %v1316, %v1356
      %v1358 = vrcp.pop %v1333
      %v1359 = vmul.f32 %v1317, %v1358
      %v1360 = vrcp.pop %v1334
      %v1361 = vmul.f32 %v1318, %v1360
      %v1362 = vrcp.pop %v1335
      %v1363 = vmul.f32 %v1319, %v1362
      %v1364 = vrcp.pop %v1336
      %v1365 = vmul.f32 %v1320, %v1364
      %v1366 = vrcp.pop %v1337
      %v1367 = vmul.f32 %v1321, %v1366
      %v1368 = vrcp.pop %v1338
      %v1369 = vmul.f32 %v1322, %v1368
      %v1370 = vrcp.pop %v1339
      %v1371 = vmul.f32 %v1323, %v1370
      %v1372 = vmul.f32 %v1341, -1.0
      %v1373 = vmul.f32 %v1343, -1.0
      %v1374 = vmul.f32 %v1345, -1.0
      %v1375 = vmul.f32 %v1347, -1.0
      %v1376 = vmul.f32 %v1349, -1.0
      %v1377 = vmul.f32 %v1351, -1.0
      %v1378 = vmul.f32 %v1353, -1.0
      %v1379 = vmul.f32 %v1355, -1.0
      %v1380 = vmul.f32 %v1357, -1.0
      %v1381 = vmul.f32 %v1359, -1.0
      %v1382 = vmul.f32 %v1361, -1.0
      %v1383 = vmul.f32 %v1363, -1.0
      %v1384 = vmul.f32 %v1365, -1.0
      %v1385 = vmul.f32 %v1367, -1.0
      %v1386 = vmul.f32 %v1369, -1.0
      %v1387 = vmul.f32 %v1371, -1.0
      %v1388 = vlaneseq
      %v1389 = vshrl.u32 %v1388, 7
      %v1390 = vadd.s32 %v1389, 8
      %v1391 = vadd.s32 %v1389, 16
      %v1392 = vadd.s32 %v1389, 24
      %v1393 = vadd.s32 %v1389, 32
      %v1394 = vadd.s32 %v1389, 40
      %v1395 = vadd.s32 %v1389, 48
      %v1396 = vadd.s32 %v1389, 56
      %v1397 = vadd.s32 %v1389, 64
      %v1398 = vadd.s32 %v1389, 72
      %v1399 = vadd.s32 %v1389, 80
      %v1400 = vadd.s32 %v1389, 88
      %v1401 = vadd.s32 %v1389, 96
      %v1402 = vadd.s32 %v1389, 104
      %v1403 = vadd.s32 %v1389, 112
      %v1404 = vadd.s32 %v1389, 120
      %v1405 = vstv %s404
      %v1406 = vadd.s32 %v1405, %v1389
      %v1407 = vadd.s32 %v1405, %v1390
      %v1408 = vadd.s32 %v1405, %v1391
      %v1409 = vadd.s32 %v1405, %v1392
      %v1410 = vadd.s32 %v1405, %v1393
      %v1411 = vadd.s32 %v1405, %v1394
      %v1412 = vadd.s32 %v1405, %v1395
      %v1413 = vadd.s32 %v1405, %v1396
      %v1414 = vadd.s32 %v1405, %v1397
      %v1415 = vadd.s32 %v1405, %v1398
      %v1416 = vadd.s32 %v1405, %v1399
      %v1417 = vadd.s32 %v1405, %v1400
      %v1418 = vadd.s32 %v1405, %v1401
      %v1419 = vadd.s32 %v1405, %v1402
      %v1420 = vadd.s32 %v1405, %v1403
      %v1421 = vadd.s32 %v1405, %v1404
      %vm1422 = vcmp.lt.s32.totalorder %v1406, 16
      %vm1423 = vcmp.lt.s32.totalorder %v1407, 16
      %vm1424 = vcmp.lt.s32.totalorder %v1408, 16
      %vm1425 = vcmp.lt.s32.totalorder %v1409, 16
      %vm1426 = vcmp.lt.s32.totalorder %v1410, 16
      %vm1427 = vcmp.lt.s32.totalorder %v1411, 16
      %vm1428 = vcmp.lt.s32.totalorder %v1412, 16
      %vm1429 = vcmp.lt.s32.totalorder %v1413, 16
      %vm1430 = vcmp.lt.s32.totalorder %v1414, 16
      %vm1431 = vcmp.lt.s32.totalorder %v1415, 16
      %vm1432 = vcmp.lt.s32.totalorder %v1416, 16
      %vm1433 = vcmp.lt.s32.totalorder %v1417, 16
      %vm1434 = vcmp.lt.s32.totalorder %v1418, 16
      %vm1435 = vcmp.lt.s32.totalorder %v1419, 16
      %vm1436 = vcmp.lt.s32.totalorder %v1420, 16
      %vm1437 = vcmp.lt.s32.totalorder %v1421, 16
      %v1438 = vsel %vm1422, %v1372, 0.0
      %v1439 = vsel %vm1423, %v1373, 0.0
      %v1440 = vsel %vm1424, %v1374, 0.0
      %v1441 = vsel %vm1425, %v1375, 0.0
      %v1442 = vsel %vm1426, %v1376, 0.0
      %v1443 = vsel %vm1427, %v1377, 0.0
      %v1444 = vsel %vm1428, %v1378, 0.0
      %v1445 = vsel %vm1429, %v1379, 0.0
      %v1446 = vsel %vm1430, %v1380, 0.0
      %v1447 = vsel %vm1431, %v1381, 0.0
      %v1448 = vsel %vm1432, %v1382, 0.0
      %v1449 = vsel %vm1433, %v1383, 0.0
      %v1450 = vsel %vm1434, %v1384, 0.0
      %v1451 = vsel %vm1435, %v1385, 0.0
      %v1452 = vsel %vm1436, %v1386, 0.0
      %v1453 = vsel %vm1437, %v1387, 0.0
      %v1454 = vsel %vm968, %v1438, 0.0
      %v1455 = vsel %vm968, %v1439, 0.0
      %v1456 = vadd.f32 %v1454, %v1455
      %v1457 = vsel %vm968, %v1440, 0.0
      %v1458 = vadd.f32 %v1456, %v1457
      %v1459 = vsel %vm968, %v1441, 0.0
      %v1460 = vadd.f32 %v1458, %v1459
      %v1461 = vsel %vm968, %v1442, 0.0
      %v1462 = vadd.f32 %v1460, %v1461
      %v1463 = vsel %vm968, %v1443, 0.0
      %v1464 = vadd.f32 %v1462, %v1463
      %v1465 = vsel %vm968, %v1444, 0.0
      %v1466 = vadd.f32 %v1464, %v1465
      %v1467 = vsel %vm968, %v1445, 0.0
      %v1468 = vadd.f32 %v1466, %v1467
      %v1469 = vsel %vm968, %v1446, 0.0
      %v1470 = vadd.f32 %v1468, %v1469
      %v1471 = vsel %vm968, %v1447, 0.0
      %v1472 = vadd.f32 %v1470, %v1471
      %v1473 = vsel %vm968, %v1448, 0.0
      %v1474 = vadd.f32 %v1472, %v1473
      %v1475 = vsel %vm968, %v1449, 0.0
      %v1476 = vadd.f32 %v1474, %v1475
      %v1477 = vsel %vm968, %v1450, 0.0
      %v1478 = vadd.f32 %v1476, %v1477
      %v1479 = vsel %vm968, %v1451, 0.0
      %v1480 = vadd.f32 %v1478, %v1479
      %v1481 = vsel %vm968, %v1452, 0.0
      %v1482 = vadd.f32 %v1480, %v1481
      %v1483 = vsel %vm968, %v1453, 0.0
      %v1484 = vadd.f32 %v1482, %v1483
      %1485 = vadd.xlane.f32.xlu0 %v1484
      %v1486 = vpop.xlane.xlu0 %1485
      %v1487 = vrot.slane %v1486, 4
      %v1488 = vadd.f32 %v1486, %v1487
      %v1489 = vrot.slane %v1488, 2
      %v1490 = vadd.f32 %v1488, %v1489
      %v1491 = vrot.slane %v1490, 1
      %v1492 = vadd.f32 %v1490, %v1491
      %s1493 = vtos %v1492
      %v1494 = vstv %s1493
      %1495 = vst [vmem:[#allocation6] sm:$0xff] %v1494
    $region33: #{tpu_custom_call.1} parent=1 // pred_fallthru
      _
    // Predicated region
    $region34: #{tpu_custom_call.1} parent=1 // pred_check
      _
    $region35: #{tpu_custom_call.1} parent=1 // pred_check_branch
      %1497 = sbr.rel (0) target = $region37
    $region36: #{tpu_custom_call.1} parent=1 // pred_region
      %s1499 = ssub.s32 128, 128
      %1500 = vsyncadd [#allocation7], %s1499
      %s1502 = sshll.u32 [#allocation6], 4
      %s1503 = int_to_ptr.vmem [resolvable:$true] %s1502
      %1505 = dma.vmem_to_hbm [thread:$0]  %s1503, 128, %s4, [#allocation7]
    $region37: #{tpu_custom_call.1} parent=1 // pred_fallthru
      _
    // Predicated region
    $region38: #{tpu_custom_call.1} parent=1 // pred_check
      _
    $region39: #{tpu_custom_call.1} parent=1 // pred_check_branch
      %1507 = sbr.rel (0) target = $region41
    $region40: #{tpu_custom_call.1} parent=1 // pred_region
      %1508 = dma.done [#allocation7], 128
    $region41: #{tpu_custom_call.1} parent=1 // pred_fallthru
      _
    %1509 = vsyncpa [#allocation7], 1

</llo_original>
